<compile_context>
chip_gen: v6e
topology: v6e:2x2x1
jax: 0.10.0
libtpu: 0.0.40
codegen_flags: <defaults>
</compile_context>

<pallas_src>
import functools

import jax
import jax.numpy as jnp
from jax import lax
from jax.experimental import pallas as pl
from jax.experimental.pallas import tpu as pltpu


def _round_up(x, m):
    return ((x + m - 1) // m) * m


# ----------------------------------------------------------------------------
# Fused kernel: per grid step = `tt` timesteps of the recurrence for one
# batch block, with the input projection for the chunk done as one MXU matmul.
# ----------------------------------------------------------------------------
def lstm_fused_kernel(x_ref, wx_ref, wh_ref, b_ref, out_ref,
                      gx_ref, h_ref, c_ref):
    # x_ref  : (tt, tb, D)    bf16  time-major input chunk
    # wx_ref : (D, 4*Hp)      bf16  input-projection weights (single-buffered)
    # wh_ref : (Hp, 4*Hp)     bf16  recurrent weights        (single-buffered)
    # b_ref  : (1, 4*Hp)      f32   fused bias               (single-buffered)
    # out_ref: (tb, Hp)             final hidden state for this batch block
    # gx_ref : (tt, tb, 4*Hp) f32   VMEM scratch: chunk gate pre-activations
    # h_ref, c_ref : (tb, Hp) f32   VMEM carries (persist across time chunks)
    tt, tb, D = x_ref.shape
    Hp = h_ref.shape[-1]
    ti = pl.program_id(1)

    # initHidden(): zeros at the first time chunk of each batch block.
    # NOTE: correctness relies on time being the inner "arbitrary" grid axis
    # (per-batch-block sequential iteration over time chunks).
    @pl.when(ti == 0)
    def _():
        h_ref[...] = jnp.zeros_like(h_ref)
        c_ref[...] = jnp.zeros_like(c_ref)

    # Fused input projection for the whole chunk: one well-shaped MXU matmul,
    # bias folded in, f32 accumulation.  Lives only in VMEM.
    x2d = x_ref[...].reshape(tt * tb, D)                       # leading-dim collapse
    gx = jnp.dot(x2d, wx_ref[...], preferred_element_type=jnp.float32) + b_ref[...]
    gx_ref[...] = gx.reshape(tt, tb, 4 * Hp)

    wh = wh_ref[...]  # hoisted out of the time loop

    def step(t, carry):
        h, c = carry
        gates = (
            jnp.dot(h.astype(wh.dtype), wh, preferred_element_type=jnp.float32)
            + gx_ref[t]                                        # (tb, 4*Hp) slab
        )
        # Gate order [f, i, o, C]; one EUP sigmoid over the [f,i,o] slab.
        sg = jax.nn.sigmoid(gates[:, : 3 * Hp])
        f = sg[:, 0 * Hp:1 * Hp]
        i = sg[:, 1 * Hp:2 * Hp]
        o = sg[:, 2 * Hp:3 * Hp]
        Cbar = jnp.tanh(gates[:, 3 * Hp:])
        c = f * c + i * Cbar
        h = o * jnp.tanh(c)
        return h, c

    h, c = lax.fori_loop(0, tt, step, (h_ref[...], c_ref[...]),
                         unroll=True if tt <= 8 else 2)
    h_ref[...] = h
    c_ref[...] = c

    # Only the final chunk's hidden state is the module output.
    @pl.when(ti == pl.num_programs(1) - 1)
    def _():
        out_ref[...] = h.astype(out_ref.dtype)


# ----------------------------------------------------------------------------
# Wrapper
# ----------------------------------------------------------------------------
def _pick_time_chunk(T, tb, D, Hp, budget_bytes, cap=64):
    """Largest divisor of T whose per-chunk VMEM working set fits the budget."""
    def vmem_bytes(tt):
        x_blk = 2 * tt * tb * D * 2                      # bf16 x chunk, double-buffered
        gx = 2 * tt * tb * 4 * Hp * 4                    # f32 gate scratch (+matmul temp)
        wts = D * 4 * Hp * 2 + Hp * 4 * Hp * 2 + 4 * Hp * 4   # single-buffered consts
        carry = 2 * tb * Hp * 4
        out = 2 * tb * Hp * 4
        return x_blk + gx + wts + carry + out
    best = 1
    for tt in range(1, min(T, cap) + 1):
        if T % tt == 0 and vmem_bytes(tt) <= budget_bytes:
            best = tt
    return best
    # TODO(synk): prime / indivisible T falls back to small tt (correct, slower);
    # a ragged-last-chunk path would avoid the cliff.


@functools.partial(jax.jit, static_argnames=("batch_block", "vmem_budget_bytes"))
def lstm_forward(x, w, b, *, batch_block=128, vmem_budget_bytes=24 * 1024 * 1024):
    """x: (B, T, D) f32; w: (D+H, 4H) fused [f,i,o,C]; b: (1, 4H). -> (B, H)."""
    B, T, D = x.shape
    H = w.shape[1] // 4
    out_dtype = x.dtype

    # Lane-pad hidden size to a multiple of 128 (lane-dense gates/carries/output).
    Hp = _round_up(H, 128)
    four_hp = 4 * Hp

    # Batch block: as large as the MXU wants (default 128) but no larger than
    # the sublane-rounded batch; pad B to a multiple of tb.
    tb = min(_round_up(batch_block, 8), _round_up(B, 8))
    B_pad = _round_up(B, tb)
    if B_pad != B:
        x = jnp.pad(x, ((0, B_pad - B), (0, 0), (0, 0)))
    # TODO(synk): on v7x (2 TensorCores) keep B_pad // tb >= 2 when B allows so
    # the "parallel" batch axis actually uses both cores.

    # Time chunk: as much of T as fits the VMEM working-set budget.
    tt = _pick_time_chunk(T, tb, D, Hp, vmem_budget_bytes)

    # Split + lane-pad the fused weights (padded columns/rows and bias are 0,
    # so padded h/c lanes stay exactly 0 through the recurrence).
    w_x = w[:D]          # (D, 4H)
    w_h = w[D:]          # (H, 4H)
    if Hp != H:
        pad_g = ((0, 0), (0, 0), (0, Hp - H))
        w_x = jnp.pad(w_x.reshape(D, 4, H), pad_g).reshape(D, four_hp)
        w_h = jnp.pad(w_h, ((0, Hp - H), (0, 0)))
        w_h = jnp.pad(w_h.reshape(Hp, 4, H), pad_g).reshape(Hp, four_hp)
        b = jnp.pad(b.reshape(1, 4, H), pad_g).reshape(1, four_hp)
    w_x = w_x.astype(jnp.bfloat16)
    w_h = w_h.astype(jnp.bfloat16)
    b_f32 = b.astype(jnp.float32)

    # Time-major bf16 view of x (single fused XLA transpose + downcast pass).
    xt = jnp.transpose(x, (1, 0, 2)).astype(jnp.bfloat16)      # (T, B_pad, D)

    h_last = pl.pallas_call(
        lstm_fused_kernel,
        out_shape=jax.ShapeDtypeStruct((B_pad, Hp), out_dtype),
        grid_spec=pltpu.PrefetchScalarGridSpec(
            num_scalar_prefetch=0,
            grid=(B_pad // tb, T // tt),
            in_specs=[
                pl.BlockSpec((tt, tb, D), lambda bi, ti: (ti, bi, 0)),
                pl.BlockSpec((D, four_hp), lambda bi, ti: (0, 0),
                             pipeline_mode=pl.Buffered(1)),
                pl.BlockSpec((Hp, four_hp), lambda bi, ti: (0, 0),
                             pipeline_mode=pl.Buffered(1)),
                pl.BlockSpec((1, four_hp), lambda bi, ti: (0, 0),
                             pipeline_mode=pl.Buffered(1)),
            ],
            out_specs=pl.BlockSpec((tb, Hp), lambda bi, ti: (bi, 0)),
            scratch_shapes=[
                pltpu.VMEM((tt, tb, four_hp), jnp.float32),   # gate pre-activations
                pltpu.VMEM((tb, Hp), jnp.float32),            # hidden-state carry
                pltpu.VMEM((tb, Hp), jnp.float32),            # cell-state carry
            ],
        ),
        compiler_params=pltpu.CompilerParams(
            dimension_semantics=("parallel", "arbitrary"),
            vmem_limit_bytes=64 * 1024 * 1024,
        ),
    )(xt, w_x, w_h, b_f32)

    return h_last[:B, :H]


# ----------------------------------------------------------------------------
# Pure-JAX reference (mirrors the PyTorch module, output_last=True), full f32.
# ----------------------------------------------------------------------------
def lstm_reference(x, w, b):
    B, T, D = x.shape
    H = w.shape[1] // 4
    h = jnp.zeros((B, H), jnp.float32)
    c = jnp.zeros((B, H), jnp.float32)
    for t in range(T):
        combined = jnp.concatenate([x[:, t, :], h], axis=1)
        gates = combined @ w + b
        f = jax.nn.sigmoid(gates[:, 0 * H:1 * H])
        i = jax.nn.sigmoid(gates[:, 1 * H:2 * H])
        o = jax.nn.sigmoid(gates[:, 2 * H:3 * H])
        C = jnp.tanh(gates[:, 3 * H:4 * H])
        c = f * c + i * C
        h = o * jnp.tanh(c)
    return h


if __name__ == "__main__":
    # Small shapes consistent with the module's forward:
    # inputs: (batch, time_step, input_size); hidden_size == cell_size == 32.
    B, T, D, H = 2, 8, 16, 32

    key = jax.random.PRNGKey(0)
    kx, kw, kb = jax.random.split(key, 3)

    x = jax.random.normal(kx, (B, T, D), dtype=jnp.float32)

    # PyTorch-Linear-style uniform(-1/sqrt(fan_in), +1/sqrt(fan_in)) init.
    fan_in = D + H
    bound = 1.0 / jnp.sqrt(jnp.float32(fan_in))
    # Fused weight for gates [f, i, o, C]: (D+H, 4H); fused bias: (1, 4H).
    w = jax.random.uniform(kw, (fan_in, 4 * H), jnp.float32, -bound, bound)
    b = jax.random.uniform(kb, (1, 4 * H), jnp.float32, -bound, bound)

    out = lstm_forward(x, w, b)
    out = jax.block_until_ready(out)

    ref = lstm_reference(x, w, b)
    assert out.shape == (B, H)
    # bf16 matmul operands (f32 accumulation) vs full-f32 reference.
    assert jnp.allclose(out, ref, atol=2e-2, rtol=2e-2), "mismatch vs reference"

    print("KERNEL_OK")
</pallas_src>

<mosaic_0001>
module attributes {stable_mosaic.version = 11 : i64} {
  func.func @lstm_fused_kernel(%arg0: i32, %arg1: i32, %arg2: memref<8x8x16xbf16, #tpu.memory_space<vmem>>, %arg3: memref<16x512xbf16, #tpu.memory_space<vmem>>, %arg4: memref<128x512xbf16, #tpu.memory_space<vmem>>, %arg5: memref<1x512xf32, #tpu.memory_space<vmem>>, %arg6: memref<8x128xf32, #tpu.memory_space<vmem>>, %arg7: memref<8x8x512xf32, #tpu.memory_space<vmem>>, %arg8: memref<8x128xf32, #tpu.memory_space<vmem>>, %arg9: memref<8x128xf32, #tpu.memory_space<vmem>>) attributes {dimension_semantics = [#tpu.dimension_semantics<parallel>, #tpu.dimension_semantics<arbitrary>], iteration_bounds = array<i64: 1, 1>, scalar_prefetch = 0 : i64, scratch_operands = 3 : i64, tpu.core_type = #tpu.core_type<tc>, window_params = [{transform_indices = @transform_0, window_bounds = array<i64: 8, 8, 16>}, {pipeline_mode = #tpu.pipeline_mode<synchronous>, transform_indices = @transform_1, window_bounds = array<i64: 16, 512>}, {pipeline_mode = #tpu.pipeline_mode<synchronous>, transform_indices = @transform_2, window_bounds = array<i64: 128, 512>}, {pipeline_mode = #tpu.pipeline_mode<synchronous>, transform_indices = @transform_3, window_bounds = array<i64: 1, 512>}, {transform_indices = @transform_4, window_bounds = array<i64: 8, 128>}]} {
    %c0_i32 = arith.constant 0 : i32
    %0 = arith.cmpi eq, %arg1, %c0_i32 : i32
    %1 = arith.extui %0 : i1 to i32
    %c0_i32_0 = arith.constant 0 : i32
    %2 = arith.cmpi ne, %1, %c0_i32_0 : i32
    scf.if %2 {
      %cst_55 = arith.constant 0.000000e+00 : f32
      %196 = vector.broadcast %cst_55 : f32 to vector<8x128xf32>
      %c0_56 = arith.constant 0 : index
      %c0_57 = arith.constant 0 : index
      %197 = vector.load %arg8[%c0_56, %c0_57] : memref<8x128xf32, #tpu.memory_space<vmem>>, vector<8x128xf32>
      tpu.vector_store %arg8[%c0_56, %c0_57], %196 {strides = array<i32>} : memref<8x128xf32, #tpu.memory_space<vmem>>, vector<8x128xf32>,
      %cst_58 = arith.constant 0.000000e+00 : f32
      %198 = vector.broadcast %cst_58 : f32 to vector<8x128xf32>
      %c0_59 = arith.constant 0 : index
      %c0_60 = arith.constant 0 : index
      %199 = vector.load %arg9[%c0_59, %c0_60] : memref<8x128xf32, #tpu.memory_space<vmem>>, vector<8x128xf32>
      tpu.vector_store %arg9[%c0_59, %c0_60], %198 {strides = array<i32>} : memref<8x128xf32, #tpu.memory_space<vmem>>, vector<8x128xf32>,
    } else {
    }
    %c0 = arith.constant 0 : index
    %c0_1 = arith.constant 0 : index
    %c0_2 = arith.constant 0 : index
    %3 = vector.load %arg2[%c0, %c0_1, %c0_2] : memref<8x8x16xbf16, #tpu.memory_space<vmem>>, vector<8x8x16xbf16>
    %4 = vector.shape_cast %3 : vector<8x8x16xbf16> to vector<64x16xbf16>
    %c0_3 = arith.constant 0 : index
    %c0_4 = arith.constant 0 : index
    %5 = vector.load %arg3[%c0_3, %c0_4] : memref<16x512xbf16, #tpu.memory_space<vmem>>, vector<16x512xbf16>
    %cst = arith.constant dense<0.000000e+00> : vector<64x512xf32>
    %6 = tpu.matmul %4, %5, %cst {dimension_numbers = #tpu.dot_dimension_numbers<[1], [0], [0], [1], [0, 0, 1, 1], [], []>} : vector<64x16xbf16>, vector<16x512xbf16>, vector<64x512xf32> -> vector<64x512xf32>
    %c0_5 = arith.constant 0 : index
    %c0_6 = arith.constant 0 : index
    %7 = vector.load %arg5[%c0_5, %c0_6] : memref<1x512xf32, #tpu.memory_space<vmem>>, vector<1x512xf32>
    %8 = vector.broadcast %7 : vector<1x512xf32> to vector<64x512xf32>
    %9 = arith.addf %6, %8 : vector<64x512xf32>
    %10 = vector.shape_cast %9 : vector<64x512xf32> to vector<8x8x512xf32>
    %c0_7 = arith.constant 0 : index
    %c0_8 = arith.constant 0 : index
    %c0_9 = arith.constant 0 : index
    %11 = vector.load %arg7[%c0_7, %c0_8, %c0_9] : memref<8x8x512xf32, #tpu.memory_space<vmem>>, vector<8x8x512xf32>
    tpu.vector_store %arg7[%c0_7, %c0_8, %c0_9], %10 {strides = array<i32>} : memref<8x8x512xf32, #tpu.memory_space<vmem>>, vector<8x8x512xf32>,
    %c0_10 = arith.constant 0 : index
    %c0_11 = arith.constant 0 : index
    %12 = vector.load %arg4[%c0_10, %c0_11] : memref<128x512xbf16, #tpu.memory_space<vmem>>, vector<128x512xbf16>
    %c0_12 = arith.constant 0 : index
    %c0_13 = arith.constant 0 : index
    %13 = vector.load %arg8[%c0_12, %c0_13] : memref<8x128xf32, #tpu.memory_space<vmem>>, vector<8x128xf32>
    %c0_14 = arith.constant 0 : index
    %c0_15 = arith.constant 0 : index
    %14 = vector.load %arg9[%c0_14, %c0_15] : memref<8x128xf32, #tpu.memory_space<vmem>>, vector<8x128xf32>
    %c0_i32_16 = arith.constant 0 : i32
    %15 = arith.truncf %13 : vector<8x128xf32> to vector<8x128xbf16>
    %cst_17 = arith.constant dense<0.000000e+00> : vector<8x512xf32>
    %16 = tpu.matmul %15, %12, %cst_17 {dimension_numbers = #tpu.dot_dimension_numbers<[1], [0], [0], [1], [0, 0, 1, 1], [], []>} : vector<8x128xbf16>, vector<128x512xbf16>, vector<8x512xf32> -> vector<8x512xf32>
    %17 = arith.index_cast %c0_i32_16 : i32 to index
    %c0_18 = arith.constant 0 : index
    %c0_19 = arith.constant 0 : index
    %18 = vector.load %arg7[%17, %c0_18, %c0_19] : memref<8x8x512xf32, #tpu.memory_space<vmem>>, vector<1x8x512xf32>
    %19 = vector.shape_cast %18 : vector<1x8x512xf32> to vector<8x512xf32>
    %20 = arith.addf %16, %19 : vector<8x512xf32>
    %21 = vector.extract_strided_slice %20 {offsets = [0, 0], sizes = [8, 384], strides = [1, 1]} : vector<8x512xf32> to vector<8x384xf32>
    %22 = arith.negf %21 : vector<8x384xf32>
    %23 = math.exp %22 : vector<8x384xf32>
    %cst_20 = arith.constant 1.000000e+00 : f32
    %24 = vector.broadcast %cst_20 : f32 to vector<8x384xf32>
    %25 = arith.addf %24, %23 : vector<8x384xf32>
    %26 = arith.divf %24, %25 : vector<8x384xf32>
    %27 = vector.extract_strided_slice %26 {offsets = [0, 0], sizes = [8, 128], strides = [1, 1]} : vector<8x384xf32> to vector<8x128xf32>
    %28 = vector.extract_strided_slice %26 {offsets = [0, 128], sizes = [8, 128], strides = [1, 1]} : vector<8x384xf32> to vector<8x128xf32>
    %29 = vector.extract_strided_slice %26 {offsets = [0, 256], sizes = [8, 128], strides = [1, 1]} : vector<8x384xf32> to vector<8x128xf32>
    %30 = vector.extract_strided_slice %20 {offsets = [0, 384], sizes = [8, 128], strides = [1, 1]} : vector<8x512xf32> to vector<8x128xf32>
    %31 = math.tanh %30 : vector<8x128xf32>
    %32 = arith.mulf %27, %14 : vector<8x128xf32>
    %33 = arith.mulf %28, %31 : vector<8x128xf32>
    %34 = arith.addf %32, %33 : vector<8x128xf32>
    %35 = math.tanh %34 : vector<8x128xf32>
    %36 = arith.mulf %29, %35 : vector<8x128xf32>
    %c1_i32 = arith.constant 1 : i32
    %37 = arith.truncf %36 : vector<8x128xf32> to vector<8x128xbf16>
    %cst_21 = arith.constant dense<0.000000e+00> : vector<8x512xf32>
    %38 = tpu.matmul %37, %12, %cst_21 {dimension_numbers = #tpu.dot_dimension_numbers<[1], [0], [0], [1], [0, 0, 1, 1], [], []>} : vector<8x128xbf16>, vector<128x512xbf16>, vector<8x512xf32> -> vector<8x512xf32>
    %39 = arith.index_cast %c1_i32 : i32 to index
    %c0_22 = arith.constant 0 : index
    %c0_23 = arith.constant 0 : index
    %40 = vector.load %arg7[%39, %c0_22, %c0_23] : memref<8x8x512xf32, #tpu.memory_space<vmem>>, vector<1x8x512xf32>
    %41 = vector.shape_cast %40 : vector<1x8x512xf32> to vector<8x512xf32>
    %42 = arith.addf %38, %41 : vector<8x512xf32>
    %43 = vector.extract_strided_slice %42 {offsets = [0, 0], sizes = [8, 384], strides = [1, 1]} : vector<8x512xf32> to vector<8x384xf32>
    %44 = arith.negf %43 : vector<8x384xf32>
    %45 = math.exp %44 : vector<8x384xf32>
    %cst_24 = arith.constant 1.000000e+00 : f32
    %46 = vector.broadcast %cst_24 : f32 to vector<8x384xf32>
    %47 = arith.addf %46, %45 : vector<8x384xf32>
    %48 = arith.divf %46, %47 : vector<8x384xf32>
    %49 = vector.extract_strided_slice %48 {offsets = [0, 0], sizes = [8, 128], strides = [1, 1]} : vector<8x384xf32> to vector<8x128xf32>
    %50 = vector.extract_strided_slice %48 {offsets = [0, 128], sizes = [8, 128], strides = [1, 1]} : vector<8x384xf32> to vector<8x128xf32>
    %51 = vector.extract_strided_slice %48 {offsets = [0, 256], sizes = [8, 128], strides = [1, 1]} : vector<8x384xf32> to vector<8x128xf32>
    %52 = vector.extract_strided_slice %42 {offsets = [0, 384], sizes = [8, 128], strides = [1, 1]} : vector<8x512xf32> to vector<8x128xf32>
    %53 = math.tanh %52 : vector<8x128xf32>
    %54 = arith.mulf %49, %34 : vector<8x128xf32>
    %55 = arith.mulf %50, %53 : vector<8x128xf32>
    %56 = arith.addf %54, %55 : vector<8x128xf32>
    %57 = math.tanh %56 : vector<8x128xf32>
    %58 = arith.mulf %51, %57 : vector<8x128xf32>
    %c2_i32 = arith.constant 2 : i32
    %59 = arith.truncf %58 : vector<8x128xf32> to vector<8x128xbf16>
    %cst_25 = arith.constant dense<0.000000e+00> : vector<8x512xf32>
    %60 = tpu.matmul %59, %12, %cst_25 {dimension_numbers = #tpu.dot_dimension_numbers<[1], [0], [0], [1], [0, 0, 1, 1], [], []>} : vector<8x128xbf16>, vector<128x512xbf16>, vector<8x512xf32> -> vector<8x512xf32>
    %61 = arith.index_cast %c2_i32 : i32 to index
    %c0_26 = arith.constant 0 : index
    %c0_27 = arith.constant 0 : index
    %62 = vector.load %arg7[%61, %c0_26, %c0_27] : memref<8x8x512xf32, #tpu.memory_space<vmem>>, vector<1x8x512xf32>
    %63 = vector.shape_cast %62 : vector<1x8x512xf32> to vector<8x512xf32>
    %64 = arith.addf %60, %63 : vector<8x512xf32>
    %65 = vector.extract_strided_slice %64 {offsets = [0, 0], sizes = [8, 384], strides = [1, 1]} : vector<8x512xf32> to vector<8x384xf32>
    %66 = arith.negf %65 : vector<8x384xf32>
    %67 = math.exp %66 : vector<8x384xf32>
    %cst_28 = arith.constant 1.000000e+00 : f32
    %68 = vector.broadcast %cst_28 : f32 to vector<8x384xf32>
    %69 = arith.addf %68, %67 : vector<8x384xf32>
    %70 = arith.divf %68, %69 : vector<8x384xf32>
    %71 = vector.extract_strided_slice %70 {offsets = [0, 0], sizes = [8, 128], strides = [1, 1]} : vector<8x384xf32> to vector<8x128xf32>
    %72 = vector.extract_strided_slice %70 {offsets = [0, 128], sizes = [8, 128], strides = [1, 1]} : vector<8x384xf32> to vector<8x128xf32>
    %73 = vector.extract_strided_slice %70 {offsets = [0, 256], sizes = [8, 128], strides = [1, 1]} : vector<8x384xf32> to vector<8x128xf32>
    %74 = vector.extract_strided_slice %64 {offsets = [0, 384], sizes = [8, 128], strides = [1, 1]} : vector<8x512xf32> to vector<8x128xf32>
    %75 = math.tanh %74 : vector<8x128xf32>
    %76 = arith.mulf %71, %56 : vector<8x128xf32>
    %77 = arith.mulf %72, %75 : vector<8x128xf32>
    %78 = arith.addf %76, %77 : vector<8x128xf32>
    %79 = math.tanh %78 : vector<8x128xf32>
    %80 = arith.mulf %73, %79 : vector<8x128xf32>
    %c3_i32 = arith.constant 3 : i32
    %81 = arith.truncf %80 : vector<8x128xf32> to vector<8x128xbf16>
    %cst_29 = arith.constant dense<0.000000e+00> : vector<8x512xf32>
    %82 = tpu.matmul %81, %12, %cst_29 {dimension_numbers = #tpu.dot_dimension_numbers<[1], [0], [0], [1], [0, 0, 1, 1], [], []>} : vector<8x128xbf16>, vector<128x512xbf16>, vector<8x512xf32> -> vector<8x512xf32>
    %83 = arith.index_cast %c3_i32 : i32 to index
    %c0_30 = arith.constant 0 : index
    %c0_31 = arith.constant 0 : index
    %84 = vector.load %arg7[%83, %c0_30, %c0_31] : memref<8x8x512xf32, #tpu.memory_space<vmem>>, vector<1x8x512xf32>
    %85 = vector.shape_cast %84 : vector<1x8x512xf32> to vector<8x512xf32>
    %86 = arith.addf %82, %85 : vector<8x512xf32>
    %87 = vector.extract_strided_slice %86 {offsets = [0, 0], sizes = [8, 384], strides = [1, 1]} : vector<8x512xf32> to vector<8x384xf32>
    %88 = arith.negf %87 : vector<8x384xf32>
    %89 = math.exp %88 : vector<8x384xf32>
    %cst_32 = arith.constant 1.000000e+00 : f32
    %90 = vector.broadcast %cst_32 : f32 to vector<8x384xf32>
    %91 = arith.addf %90, %89 : vector<8x384xf32>
    %92 = arith.divf %90, %91 : vector<8x384xf32>
    %93 = vector.extract_strided_slice %92 {offsets = [0, 0], sizes = [8, 128], strides = [1, 1]} : vector<8x384xf32> to vector<8x128xf32>
    %94 = vector.extract_strided_slice %92 {offsets = [0, 128], sizes = [8, 128], strides = [1, 1]} : vector<8x384xf32> to vector<8x128xf32>
    %95 = vector.extract_strided_slice %92 {offsets = [0, 256], sizes = [8, 128], strides = [1, 1]} : vector<8x384xf32> to vector<8x128xf32>
    %96 = vector.extract_strided_slice %86 {offsets = [0, 384], sizes = [8, 128], strides = [1, 1]} : vector<8x512xf32> to vector<8x128xf32>
    %97 = math.tanh %96 : vector<8x128xf32>
    %98 = arith.mulf %93, %78 : vector<8x128xf32>
    %99 = arith.mulf %94, %97 : vector<8x128xf32>
    %100 = arith.addf %98, %99 : vector<8x128xf32>
    %101 = math.tanh %100 : vector<8x128xf32>
    %102 = arith.mulf %95, %101 : vector<8x128xf32>
    %c4_i32 = arith.constant 4 : i32
    %103 = arith.truncf %102 : vector<8x128xf32> to vector<8x128xbf16>
    %cst_33 = arith.constant dense<0.000000e+00> : vector<8x512xf32>
    %104 = tpu.matmul %103, %12, %cst_33 {dimension_numbers = #tpu.dot_dimension_numbers<[1], [0], [0], [1], [0, 0, 1, 1], [], []>} : vector<8x128xbf16>, vector<128x512xbf16>, vector<8x512xf32> -> vector<8x512xf32>
    %105 = arith.index_cast %c4_i32 : i32 to index
    %c0_34 = arith.constant 0 : index
    %c0_35 = arith.constant 0 : index
    %106 = vector.load %arg7[%105, %c0_34, %c0_35] : memref<8x8x512xf32, #tpu.memory_space<vmem>>, vector<1x8x512xf32>
    %107 = vector.shape_cast %106 : vector<1x8x512xf32> to vector<8x512xf32>
    %108 = arith.addf %104, %107 : vector<8x512xf32>
    %109 = vector.extract_strided_slice %108 {offsets = [0, 0], sizes = [8, 384], strides = [1, 1]} : vector<8x512xf32> to vector<8x384xf32>
    %110 = arith.negf %109 : vector<8x384xf32>
    %111 = math.exp %110 : vector<8x384xf32>
    %cst_36 = arith.constant 1.000000e+00 : f32
    %112 = vector.broadcast %cst_36 : f32 to vector<8x384xf32>
    %113 = arith.addf %112, %111 : vector<8x384xf32>
    %114 = arith.divf %112, %113 : vector<8x384xf32>
    %115 = vector.extract_strided_slice %114 {offsets = [0, 0], sizes = [8, 128], strides = [1, 1]} : vector<8x384xf32> to vector<8x128xf32>
    %116 = vector.extract_strided_slice %114 {offsets = [0, 128], sizes = [8, 128], strides = [1, 1]} : vector<8x384xf32> to vector<8x128xf32>
    %117 = vector.extract_strided_slice %114 {offsets = [0, 256], sizes = [8, 128], strides = [1, 1]} : vector<8x384xf32> to vector<8x128xf32>
    %118 = vector.extract_strided_slice %108 {offsets = [0, 384], sizes = [8, 128], strides = [1, 1]} : vector<8x512xf32> to vector<8x128xf32>
    %119 = math.tanh %118 : vector<8x128xf32>
    %120 = arith.mulf %115, %100 : vector<8x128xf32>
    %121 = arith.mulf %116, %119 : vector<8x128xf32>
    %122 = arith.addf %120, %121 : vector<8x128xf32>
    %123 = math.tanh %122 : vector<8x128xf32>
    %124 = arith.mulf %117, %123 : vector<8x128xf32>
    %c5_i32 = arith.constant 5 : i32
    %125 = arith.truncf %124 : vector<8x128xf32> to vector<8x128xbf16>
    %cst_37 = arith.constant dense<0.000000e+00> : vector<8x512xf32>
    %126 = tpu.matmul %125, %12, %cst_37 {dimension_numbers = #tpu.dot_dimension_numbers<[1], [0], [0], [1], [0, 0, 1, 1], [], []>} : vector<8x128xbf16>, vector<128x512xbf16>, vector<8x512xf32> -> vector<8x512xf32>
    %127 = arith.index_cast %c5_i32 : i32 to index
    %c0_38 = arith.constant 0 : index
    %c0_39 = arith.constant 0 : index
    %128 = vector.load %arg7[%127, %c0_38, %c0_39] : memref<8x8x512xf32, #tpu.memory_space<vmem>>, vector<1x8x512xf32>
    %129 = vector.shape_cast %128 : vector<1x8x512xf32> to vector<8x512xf32>
    %130 = arith.addf %126, %129 : vector<8x512xf32>
    %131 = vector.extract_strided_slice %130 {offsets = [0, 0], sizes = [8, 384], strides = [1, 1]} : vector<8x512xf32> to vector<8x384xf32>
    %132 = arith.negf %131 : vector<8x384xf32>
    %133 = math.exp %132 : vector<8x384xf32>
    %cst_40 = arith.constant 1.000000e+00 : f32
    %134 = vector.broadcast %cst_40 : f32 to vector<8x384xf32>
    %135 = arith.addf %134, %133 : vector<8x384xf32>
    %136 = arith.divf %134, %135 : vector<8x384xf32>
    %137 = vector.extract_strided_slice %136 {offsets = [0, 0], sizes = [8, 128], strides = [1, 1]} : vector<8x384xf32> to vector<8x128xf32>
    %138 = vector.extract_strided_slice %136 {offsets = [0, 128], sizes = [8, 128], strides = [1, 1]} : vector<8x384xf32> to vector<8x128xf32>
    %139 = vector.extract_strided_slice %136 {offsets = [0, 256], sizes = [8, 128], strides = [1, 1]} : vector<8x384xf32> to vector<8x128xf32>
    %140 = vector.extract_strided_slice %130 {offsets = [0, 384], sizes = [8, 128], strides = [1, 1]} : vector<8x512xf32> to vector<8x128xf32>
    %141 = math.tanh %140 : vector<8x128xf32>
    %142 = arith.mulf %137, %122 : vector<8x128xf32>
    %143 = arith.mulf %138, %141 : vector<8x128xf32>
    %144 = arith.addf %142, %143 : vector<8x128xf32>
    %145 = math.tanh %144 : vector<8x128xf32>
    %146 = arith.mulf %139, %145 : vector<8x128xf32>
    %c6_i32 = arith.constant 6 : i32
    %147 = arith.truncf %146 : vector<8x128xf32> to vector<8x128xbf16>
    %cst_41 = arith.constant dense<0.000000e+00> : vector<8x512xf32>
    %148 = tpu.matmul %147, %12, %cst_41 {dimension_numbers = #tpu.dot_dimension_numbers<[1], [0], [0], [1], [0, 0, 1, 1], [], []>} : vector<8x128xbf16>, vector<128x512xbf16>, vector<8x512xf32> -> vector<8x512xf32>
    %149 = arith.index_cast %c6_i32 : i32 to index
    %c0_42 = arith.constant 0 : index
    %c0_43 = arith.constant 0 : index
    %150 = vector.load %arg7[%149, %c0_42, %c0_43] : memref<8x8x512xf32, #tpu.memory_space<vmem>>, vector<1x8x512xf32>
    %151 = vector.shape_cast %150 : vector<1x8x512xf32> to vector<8x512xf32>
    %152 = arith.addf %148, %151 : vector<8x512xf32>
    %153 = vector.extract_strided_slice %152 {offsets = [0, 0], sizes = [8, 384], strides = [1, 1]} : vector<8x512xf32> to vector<8x384xf32>
    %154 = arith.negf %153 : vector<8x384xf32>
    %155 = math.exp %154 : vector<8x384xf32>
    %cst_44 = arith.constant 1.000000e+00 : f32
    %156 = vector.broadcast %cst_44 : f32 to vector<8x384xf32>
    %157 = arith.addf %156, %155 : vector<8x384xf32>
    %158 = arith.divf %156, %157 : vector<8x384xf32>
    %159 = vector.extract_strided_slice %158 {offsets = [0, 0], sizes = [8, 128], strides = [1, 1]} : vector<8x384xf32> to vector<8x128xf32>
    %160 = vector.extract_strided_slice %158 {offsets = [0, 128], sizes = [8, 128], strides = [1, 1]} : vector<8x384xf32> to vector<8x128xf32>
    %161 = vector.extract_strided_slice %158 {offsets = [0, 256], sizes = [8, 128], strides = [1, 1]} : vector<8x384xf32> to vector<8x128xf32>
    %162 = vector.extract_strided_slice %152 {offsets = [0, 384], sizes = [8, 128], strides = [1, 1]} : vector<8x512xf32> to vector<8x128xf32>
    %163 = math.tanh %162 : vector<8x128xf32>
    %164 = arith.mulf %159, %144 : vector<8x128xf32>
    %165 = arith.mulf %160, %163 : vector<8x128xf32>
    %166 = arith.addf %164, %165 : vector<8x128xf32>
    %167 = math.tanh %166 : vector<8x128xf32>
    %168 = arith.mulf %161, %167 : vector<8x128xf32>
    %c7_i32 = arith.constant 7 : i32
    %169 = arith.truncf %168 : vector<8x128xf32> to vector<8x128xbf16>
    %cst_45 = arith.constant dense<0.000000e+00> : vector<8x512xf32>
    %170 = tpu.matmul %169, %12, %cst_45 {dimension_numbers = #tpu.dot_dimension_numbers<[1], [0], [0], [1], [0, 0, 1, 1], [], []>} : vector<8x128xbf16>, vector<128x512xbf16>, vector<8x512xf32> -> vector<8x512xf32>
    %171 = arith.index_cast %c7_i32 : i32 to index
    %c0_46 = arith.constant 0 : index
    %c0_47 = arith.constant 0 : index
    %172 = vector.load %arg7[%171, %c0_46, %c0_47] : memref<8x8x512xf32, #tpu.memory_space<vmem>>, vector<1x8x512xf32>
    %173 = vector.shape_cast %172 : vector<1x8x512xf32> to vector<8x512xf32>
    %174 = arith.addf %170, %173 : vector<8x512xf32>
    %175 = vector.extract_strided_slice %174 {offsets = [0, 0], sizes = [8, 384], strides = [1, 1]} : vector<8x512xf32> to vector<8x384xf32>
    %176 = arith.negf %175 : vector<8x384xf32>
    %177 = math.exp %176 : vector<8x384xf32>
    %cst_48 = arith.constant 1.000000e+00 : f32
    %178 = vector.broadcast %cst_48 : f32 to vector<8x384xf32>
    %179 = arith.addf %178, %177 : vector<8x384xf32>
    %180 = arith.divf %178, %179 : vector<8x384xf32>
    %181 = vector.extract_strided_slice %180 {offsets = [0, 0], sizes = [8, 128], strides = [1, 1]} : vector<8x384xf32> to vector<8x128xf32>
    %182 = vector.extract_strided_slice %180 {offsets = [0, 128], sizes = [8, 128], strides = [1, 1]} : vector<8x384xf32> to vector<8x128xf32>
    %183 = vector.extract_strided_slice %180 {offsets = [0, 256], sizes = [8, 128], strides = [1, 1]} : vector<8x384xf32> to vector<8x128xf32>
    %184 = vector.extract_strided_slice %174 {offsets = [0, 384], sizes = [8, 128], strides = [1, 1]} : vector<8x512xf32> to vector<8x128xf32>
    %185 = math.tanh %184 : vector<8x128xf32>
    %186 = arith.mulf %181, %166 : vector<8x128xf32>
    %187 = arith.mulf %182, %185 : vector<8x128xf32>
    %188 = arith.addf %186, %187 : vector<8x128xf32>
    %189 = math.tanh %188 : vector<8x128xf32>
    %190 = arith.mulf %183, %189 : vector<8x128xf32>
    %c8_i32 = arith.constant 8 : i32
    %c0_49 = arith.constant 0 : index
    %c0_50 = arith.constant 0 : index
    %191 = vector.load %arg8[%c0_49, %c0_50] : memref<8x128xf32, #tpu.memory_space<vmem>>, vector<8x128xf32>
    tpu.vector_store %arg8[%c0_49, %c0_50], %190 {strides = array<i32>} : memref<8x128xf32, #tpu.memory_space<vmem>>, vector<8x128xf32>,
    %c0_51 = arith.constant 0 : index
    %c0_52 = arith.constant 0 : index
    %192 = vector.load %arg9[%c0_51, %c0_52] : memref<8x128xf32, #tpu.memory_space<vmem>>, vector<8x128xf32>
    tpu.vector_store %arg9[%c0_51, %c0_52], %188 {strides = array<i32>} : memref<8x128xf32, #tpu.memory_space<vmem>>, vector<8x128xf32>,
    %c0_i32_53 = arith.constant 0 : i32
    %193 = arith.cmpi eq, %arg1, %c0_i32_53 : i32
    %194 = arith.extui %193 : i1 to i32
    %c0_i32_54 = arith.constant 0 : i32
    %195 = arith.cmpi ne, %194, %c0_i32_54 : i32
    scf.if %195 {
      %c0_55 = arith.constant 0 : index
      %c0_56 = arith.constant 0 : index
      %196 = vector.load %arg6[%c0_55, %c0_56] : memref<8x128xf32, #tpu.memory_space<vmem>>, vector<8x128xf32>
      tpu.vector_store %arg6[%c0_55, %c0_56], %190 {strides = array<i32>} : memref<8x128xf32, #tpu.memory_space<vmem>>, vector<8x128xf32>,
    } else {
    }
    return
  }
  func.func @transform_0(%arg0: i32, %arg1: i32) -> (i32, i32, i32) {
    %c0_i32 = arith.constant 0 : i32
    %c0_i32_0 = arith.constant 0 : i32
    return %arg1, %arg0, %c0_i32 : i32, i32, i32
  }
  func.func @transform_1(%arg0: i32, %arg1: i32) -> (i32, i32) {
    %c0_i32 = arith.constant 0 : i32
    %c0_i32_0 = arith.constant 0 : i32
    %c0_i32_1 = arith.constant 0 : i32
    return %c0_i32, %c0_i32_0 : i32, i32
  }
  func.func @transform_2(%arg0: i32, %arg1: i32) -> (i32, i32) {
    %c0_i32 = arith.constant 0 : i32
    %c0_i32_0 = arith.constant 0 : i32
    %c0_i32_1 = arith.constant 0 : i32
    return %c0_i32, %c0_i32_0 : i32, i32
  }
  func.func @transform_3(%arg0: i32, %arg1: i32) -> (i32, i32) {
    %c0_i32 = arith.constant 0 : i32
    %c0_i32_0 = arith.constant 0 : i32
    %c0_i32_1 = arith.constant 0 : i32
    return %c0_i32, %c0_i32_0 : i32, i32
  }
  func.func @transform_4(%arg0: i32, %arg1: i32) -> (i32, i32) {
    %c0_i32 = arith.constant 0 : i32
    %c0_i32_0 = arith.constant 0 : i32
    return %arg0, %c0_i32 : i32, i32
  }
}

</mosaic_0001>

<llo_original>
// kernel: lstm_forward.1
$region0: #{lstm_forward.1}
  #allocation0 [shape = 'u32[]', space=smem, size = 0x4, offset = 0x4, fixed_abs, tag = 'smem constant byte address 0x4 - core index']
  #allocation1 [shape = 'u32[144,128]{1,0:T(1,128)}', space=vmem, size = 0x12000, scoped, tag = 'internal scratch']
  #allocation2 [shape = 'f32[8,8,512]{2,1,0:T(8,128)}', space=vmem, size = 0x20000, scoped, tag = 'scratch operand']
  #allocation3 [shape = 'f32[8,128]{1,0:T(8,128)}', space=vmem, size = 0x1000, scoped, tag = 'scratch operand']
  #allocation4 [shape = 'f32[8,128]{1,0:T(8,128)}', space=vmem, size = 0x1000, scoped, tag = 'scratch operand']
  %s0 = inlined_call_operand.vmem [shape: bf16[8,8,16], index: 0, kind: input, shape index: {}]
  %s1 = inlined_call_operand.vmem [shape: bf16[16,512], index: 1, kind: input, shape index: {}]
  %s2 = inlined_call_operand.vmem [shape: bf16[128,512], index: 2, kind: input, shape index: {}]
  %s3 = inlined_call_operand.vmem [shape: f32[1,512], index: 3, kind: input, shape index: {}]
  %s4 = inlined_call_operand.vmem [shape: f32[8,128], index: 4, kind: output, shape index: {}]
  %s5 = sld [smem:[#allocation0]]
  $region34: #{lstm_forward.1} parent=0
    _
  %s7 = ssub.s32 1, %s5
  %s8 = scalar_select 0, %s7, %s5
  // Predicated region
  $region2: #{lstm_forward.1} parent=0 // pred_check
    _
  $region3: #{lstm_forward.1} parent=0 // pred_check_branch
    %10 = sbr.rel (0) target = $region5
  $region4: #{lstm_forward.1} parent=0 // pred_region
    _
  $region5: #{lstm_forward.1} parent=0 // pred_fallthru
    _
  // Predicated region
  $region6: #{lstm_forward.1} parent=0 // pred_check
    _
  $region7: #{lstm_forward.1} parent=0 // pred_check_branch
    %12 = sbr.rel (0) target = $region9
  $region8: #{lstm_forward.1} parent=0 // pred_region
    _
  $region9: #{lstm_forward.1} parent=0 // pred_fallthru
    _
  // Predicated region
  $region10: #{lstm_forward.1} parent=0 // pred_check
    _
  $region11: #{lstm_forward.1} parent=0 // pred_check_branch
    %14 = sbr.rel (0) target = $region13
  $region12: #{lstm_forward.1} parent=0 // pred_region
    _
  $region13: #{lstm_forward.1} parent=0 // pred_fallthru
    _
  // Predicated region
  $region14: #{lstm_forward.1} parent=0 // pred_check
    _
  $region15: #{lstm_forward.1} parent=0 // pred_check_branch
    %16 = sbr.rel (0) target = $region17
  $region16: #{lstm_forward.1} parent=0 // pred_region
    _
  $region17: #{lstm_forward.1} parent=0 // pred_fallthru
    _
  %p18 = scmp.eq.s32.totalorder 0, 0
  // Predicated region
  $region18: #{lstm_forward.1} parent=0 // pred_check
    %p19 = pneg %p18
  $region19: #{lstm_forward.1} parent=0 // pred_check_branch
    %21 = sbr.rel (%p19) target = $region21
  $region20: #{lstm_forward.1} parent=0 // pred_region
    %22 = vst [vmem:[#allocation3] sm:$0xff] 0.0
    %23 = vst [vmem:[#allocation4] sm:$0xff] 0.0
  $region21: #{lstm_forward.1} parent=0 // pred_fallthru
    _
  %v24 = vld [vmem:[%s0] sm:$0xf]
  %v25 = vld [vmem:[%s0 + $0x4] sm:$0xf]
  %v26 = vld [vmem:[%s0 + $0x8] sm:$0xf]
  %v27 = vld [vmem:[%s0 + $0xc] sm:$0xf]
  %v28 = vld [vmem:[%s0 + $0x10] sm:$0xf]
  %v29 = vld [vmem:[%s0 + $0x14] sm:$0xf]
  %v30 = vld [vmem:[%s0 + $0x18] sm:$0xf]
  %v31 = vld [vmem:[%s0 + $0x1c] sm:$0xf]
  %v32 = vld [vmem:[%s1] sm:$0xff]
  %v33 = vld [vmem:[%s1 + $0x8] sm:$0xff]
  %v34 = vld [vmem:[%s1 + $0x10] sm:$0xff]
  %v35 = vld [vmem:[%s1 + $0x18] sm:$0xff]
  %v36 = vld [vmem:[%s3] sm:$0xf]
  %v38 = vlaneseq
  %v39 = vshrl.u32 %v38, 7
  %v40 = vsub.s32 0, %v39
  %v41 = vrot.slane %v36, %v40
  %v42 = vlaneseq
  %v43 = vshrl.u32 %v42, 7
  %v44 = vsub.s32 1, %v43
  %v45 = vrot.slane %v36, %v44
  %v46 = vlaneseq
  %v47 = vshrl.u32 %v46, 7
  %v48 = vsub.s32 2, %v47
  %v49 = vrot.slane %v36, %v48
  %v50 = vlaneseq
  %v51 = vshrl.u32 %v50, 7
  %v52 = vsub.s32 3, %v51
  %v53 = vrot.slane %v36, %v52
  %v66 = vunpack.c.l.b16 %v24
  %v67 = vunpack.c.l.b16 %v25
  %v68 = vunpack.c.l.b16 %v26
  %v69 = vunpack.c.l.b16 %v27
  %v70 = vunpack.c.l.b16 %v28
  %v71 = vunpack.c.l.b16 %v29
  %v72 = vunpack.c.l.b16 %v30
  %v73 = vunpack.c.l.b16 %v31
  %v74 = vpack.c.b16 %v67, %v66
  %v75 = vpack.c.b16 %v69, %v68
  %v76 = vpack.c.b16 %v71, %v70
  %v77 = vpack.c.b16 %v73, %v72
  %v82 = vunpack.c.l.b16 %v32
  %v83 = vunpack.c.h.b16 %v32
  %v84 = vunpack.c.l.b16 %v33
  %v85 = vunpack.c.h.b16 %v33
  %v86 = vunpack.c.l.b16 %v34
  %v87 = vunpack.c.h.b16 %v34
  %v88 = vunpack.c.l.b16 %v35
  %v89 = vunpack.c.h.b16 %v35
  %v90 = vpack.c.b16 %v86, %v82
  %v91 = vpack.c.b16 %v87, %v83
  %v92 = vpack.c.b16 %v88, %v84
  %v93 = vpack.c.b16 %v89, %v85
  %vm98 = vcmask 130048
  %v100 = vsel %vm98, %v74, 0
  %v103 = vsel %vm98, %v75, 0
  %v106 = vsel %vm98, %v76, 0
  %v109 = vsel %vm98, %v77, 0
  %111 = vmatprep.subr.bf16.mxu0 0
  %112 = vmatpush1.bf16.msra.mxu0 0
  %113 = vmatprep.subr.bf16.mxu0 0
  %114 = vmatpush1.bf16.msra.mxu0 0
  %115 = vmatprep.subr.bf16.mxu0 0
  %116 = vmatpush1.bf16.msra.mxu0 0
  %117 = vmatprep.subr.bf16.mxu0 0
  %118 = vmatpush1.bf16.msra.mxu0 0
  %119 = vmatprep.subr.bf16.mxu0 0
  %120 = vmatpush1.bf16.msra.mxu0 0
  %121 = vmatprep.subr.bf16.mxu0 0
  %122 = vmatpush1.bf16.msra.mxu0 0
  %123 = vmatprep.subr.bf16.mxu0 0
  %124 = vmatpush1.bf16.msra.mxu0 0
  %125 = vmatprep.subr.bf16.mxu0 %v91
  %126 = vmatpush1.bf16.msra.mxu0 %v90
  %127 = vmatprep.subr.bf16.mxu0 0
  %128 = vmatpush2.bf16.msra.mxu0 0
  %129 = vmatprep.subr.bf16.mxu0 0
  %130 = vmatpush2.bf16.msra.mxu0 0
  %131 = vmatprep.subr.bf16.mxu0 0
  %132 = vmatpush2.bf16.msra.mxu0 0
  %133 = vmatprep.subr.bf16.mxu0 0
  %134 = vmatpush2.bf16.msra.mxu0 0
  %135 = vmatprep.subr.bf16.mxu0 0
  %136 = vmatpush2.bf16.msra.mxu0 0
  %137 = vmatprep.subr.bf16.mxu0 0
  %138 = vmatpush2.bf16.msra.mxu0 0
  %139 = vmatprep.subr.bf16.mxu0 0
  %140 = vmatpush2.bf16.msra.mxu0 0
  %141 = vmatprep.subr.bf16.mxu0 0
  %142 = vmatpush2.bf16.msra.mxu0 0
  %143 = vmatprep.mubr.bf16.mxu0 0
  %144 = vmatmul.mubr.bf16.gmra.mxu0 %v100
  %v145 = vpop.f32.mrf.mxu0
  %v146 = vadd.f32 %v41, %v145
  %v147 = vpop.f32.mrf.mxu0
  %v148 = vadd.f32 %v45, %v147
  %v149 = vpop.f32.mrf.mxu0
  %v150 = vadd.f32 %v41, %v149
  %v151 = vpop.f32.mrf.mxu0
  %v152 = vadd.f32 %v45, %v151
  %153 = vmatprep.mubr.bf16.mxu0 0
  %154 = vmatmul.mubr.bf16.gmra.mxu0 %v103
  %v155 = vpop.f32.mrf.mxu0
  %v156 = vadd.f32 %v41, %v155
  %v157 = vpop.f32.mrf.mxu0
  %v158 = vadd.f32 %v45, %v157
  %v159 = vpop.f32.mrf.mxu0
  %v160 = vadd.f32 %v41, %v159
  %v161 = vpop.f32.mrf.mxu0
  %v162 = vadd.f32 %v45, %v161
  %163 = vmatprep.mubr.bf16.mxu0 0
  %164 = vmatmul.mubr.bf16.gmra.mxu0 %v106
  %v165 = vpop.f32.mrf.mxu0
  %v166 = vadd.f32 %v41, %v165
  %v167 = vpop.f32.mrf.mxu0
  %v168 = vadd.f32 %v45, %v167
  %v169 = vpop.f32.mrf.mxu0
  %v170 = vadd.f32 %v41, %v169
  %v171 = vpop.f32.mrf.mxu0
  %v172 = vadd.f32 %v45, %v171
  %173 = vmatprep.mubr.bf16.mxu0 0
  %174 = vmatmul.mubr.bf16.gmra.mxu0 %v109
  %v175 = vpop.f32.mrf.mxu0
  %v176 = vadd.f32 %v41, %v175
  %v177 = vpop.f32.mrf.mxu0
  %v178 = vadd.f32 %v45, %v177
  %v179 = vpop.f32.mrf.mxu0
  %v180 = vadd.f32 %v41, %v179
  %v181 = vpop.f32.mrf.mxu0
  %v182 = vadd.f32 %v45, %v181
  %183 = vdwg.mxu0
  %184 = vmatprep.subr.bf16.mxu0 0
  %185 = vmatpush1.bf16.msra.mxu0 0
  %186 = vmatprep.subr.bf16.mxu0 0
  %187 = vmatpush1.bf16.msra.mxu0 0
  %188 = vmatprep.subr.bf16.mxu0 0
  %189 = vmatpush1.bf16.msra.mxu0 0
  %190 = vmatprep.subr.bf16.mxu0 0
  %191 = vmatpush1.bf16.msra.mxu0 0
  %192 = vmatprep.subr.bf16.mxu0 0
  %193 = vmatpush1.bf16.msra.mxu0 0
  %194 = vmatprep.subr.bf16.mxu0 0
  %195 = vmatpush1.bf16.msra.mxu0 0
  %196 = vmatprep.subr.bf16.mxu0 0
  %197 = vmatpush1.bf16.msra.mxu0 0
  %198 = vmatprep.subr.bf16.mxu0 %v93
  %199 = vmatpush1.bf16.msra.mxu0 %v92
  %200 = vmatprep.subr.bf16.mxu0 0
  %201 = vmatpush2.bf16.msra.mxu0 0
  %202 = vmatprep.subr.bf16.mxu0 0
  %203 = vmatpush2.bf16.msra.mxu0 0
  %204 = vmatprep.subr.bf16.mxu0 0
  %205 = vmatpush2.bf16.msra.mxu0 0
  %206 = vmatprep.subr.bf16.mxu0 0
  %207 = vmatpush2.bf16.msra.mxu0 0
  %208 = vmatprep.subr.bf16.mxu0 0
  %209 = vmatpush2.bf16.msra.mxu0 0
  %210 = vmatprep.subr.bf16.mxu0 0
  %211 = vmatpush2.bf16.msra.mxu0 0
  %212 = vmatprep.subr.bf16.mxu0 0
  %213 = vmatpush2.bf16.msra.mxu0 0
  %214 = vmatprep.subr.bf16.mxu0 0
  %215 = vmatpush2.bf16.msra.mxu0 0
  %216 = vmatprep.mubr.bf16.mxu0 0
  %217 = vmatmul.mubr.bf16.gmra.mxu0 %v100
  %v218 = vpop.f32.mrf.mxu0
  %v219 = vadd.f32 %v49, %v218
  %v220 = vpop.f32.mrf.mxu0
  %v221 = vadd.f32 %v53, %v220
  %v222 = vpop.f32.mrf.mxu0
  %v223 = vadd.f32 %v49, %v222
  %v224 = vpop.f32.mrf.mxu0
  %v225 = vadd.f32 %v53, %v224
  %226 = vmatprep.mubr.bf16.mxu0 0
  %227 = vmatmul.mubr.bf16.gmra.mxu0 %v103
  %v228 = vpop.f32.mrf.mxu0
  %v229 = vadd.f32 %v49, %v228
  %v230 = vpop.f32.mrf.mxu0
  %v231 = vadd.f32 %v53, %v230
  %v232 = vpop.f32.mrf.mxu0
  %v233 = vadd.f32 %v49, %v232
  %v234 = vpop.f32.mrf.mxu0
  %v235 = vadd.f32 %v53, %v234
  %236 = vmatprep.mubr.bf16.mxu0 0
  %237 = vmatmul.mubr.bf16.gmra.mxu0 %v106
  %v238 = vpop.f32.mrf.mxu0
  %v239 = vadd.f32 %v49, %v238
  %v240 = vpop.f32.mrf.mxu0
  %v241 = vadd.f32 %v53, %v240
  %v242 = vpop.f32.mrf.mxu0
  %v243 = vadd.f32 %v49, %v242
  %v244 = vpop.f32.mrf.mxu0
  %v245 = vadd.f32 %v53, %v244
  %246 = vmatprep.mubr.bf16.mxu0 0
  %247 = vmatmul.mubr.bf16.gmra.mxu0 %v109
  %v248 = vpop.f32.mrf.mxu0
  %v249 = vadd.f32 %v49, %v248
  %v250 = vpop.f32.mrf.mxu0
  %v251 = vadd.f32 %v53, %v250
  %v252 = vpop.f32.mrf.mxu0
  %v253 = vadd.f32 %v49, %v252
  %v254 = vpop.f32.mrf.mxu0
  %v255 = vadd.f32 %v53, %v254
  %256 = vdwg.mxu0
  %257 = vst [vmem:[#allocation2] sm:$0xff] %v146
  %258 = vst [vmem:[#allocation2 + $0x8] sm:$0xff] %v148
  %259 = vst [vmem:[#allocation2 + $0x10] sm:$0xff] %v219
  %260 = vst [vmem:[#allocation2 + $0x18] sm:$0xff] %v221
  %261 = vst [vmem:[#allocation2 + $0x20] sm:$0xff] %v150
  %262 = vst [vmem:[#allocation2 + $0x28] sm:$0xff] %v152
  %263 = vst [vmem:[#allocation2 + $0x30] sm:$0xff] %v223
  %264 = vst [vmem:[#allocation2 + $0x38] sm:$0xff] %v225
  %265 = vst [vmem:[#allocation2 + $0x40] sm:$0xff] %v156
  %266 = vst [vmem:[#allocation2 + $0x48] sm:$0xff] %v158
  %267 = vst [vmem:[#allocation2 + $0x50] sm:$0xff] %v229
  %268 = vst [vmem:[#allocation2 + $0x58] sm:$0xff] %v231
  %269 = vst [vmem:[#allocation2 + $0x60] sm:$0xff] %v160
  %270 = vst [vmem:[#allocation2 + $0x68] sm:$0xff] %v162
  %271 = vst [vmem:[#allocation2 + $0x70] sm:$0xff] %v233
  %272 = vst [vmem:[#allocation2 + $0x78] sm:$0xff] %v235
  %273 = vst [vmem:[#allocation2 + $0x80] sm:$0xff] %v166
  %274 = vst [vmem:[#allocation2 + $0x88] sm:$0xff] %v168
  %275 = vst [vmem:[#allocation2 + $0x90] sm:$0xff] %v239
  %276 = vst [vmem:[#allocation2 + $0x98] sm:$0xff] %v241
  %277 = vst [vmem:[#allocation2 + $0xa0] sm:$0xff] %v170
  %278 = vst [vmem:[#allocation2 + $0xa8] sm:$0xff] %v172
  %279 = vst [vmem:[#allocation2 + $0xb0] sm:$0xff] %v243
  %280 = vst [vmem:[#allocation2 + $0xb8] sm:$0xff] %v245
  %281 = vst [vmem:[#allocation2 + $0xc0] sm:$0xff] %v176
  %282 = vst [vmem:[#allocation2 + $0xc8] sm:$0xff] %v178
  %283 = vst [vmem:[#allocation2 + $0xd0] sm:$0xff] %v249
  %284 = vst [vmem:[#allocation2 + $0xd8] sm:$0xff] %v251
  %285 = vst [vmem:[#allocation2 + $0xe0] sm:$0xff] %v180
  %286 = vst [vmem:[#allocation2 + $0xe8] sm:$0xff] %v182
  %287 = vst [vmem:[#allocation2 + $0xf0] sm:$0xff] %v253
  %288 = vst [vmem:[#allocation2 + $0xf8] sm:$0xff] %v255
  %v289 = vld [vmem:[%s2] sm:$0xff]
  %v290 = vld [vmem:[%s2 + $0x8] sm:$0xff]
  %v291 = vld [vmem:[%s2 + $0x10] sm:$0xff]
  %v292 = vld [vmem:[%s2 + $0x18] sm:$0xff]
  %v293 = vld [vmem:[%s2 + $0x20] sm:$0xff]
  %v294 = vld [vmem:[%s2 + $0x28] sm:$0xff]
  %v295 = vld [vmem:[%s2 + $0x30] sm:$0xff]
  %v296 = vld [vmem:[%s2 + $0x38] sm:$0xff]
  %v297 = vld [vmem:[%s2 + $0x40] sm:$0xff]
  %v298 = vld [vmem:[%s2 + $0x48] sm:$0xff]
  %v299 = vld [vmem:[%s2 + $0x50] sm:$0xff]
  %v300 = vld [vmem:[%s2 + $0x58] sm:$0xff]
  %v301 = vld [vmem:[%s2 + $0x60] sm:$0xff]
  %v302 = vld [vmem:[%s2 + $0x68] sm:$0xff]
  %v303 = vld [vmem:[%s2 + $0x70] sm:$0xff]
  %v304 = vld [vmem:[%s2 + $0x78] sm:$0xff]
  %v305 = vld [vmem:[%s2 + $0x80] sm:$0xff]
  %v306 = vld [vmem:[%s2 + $0x88] sm:$0xff]
  %v307 = vld [vmem:[%s2 + $0x90] sm:$0xff]
  %v308 = vld [vmem:[%s2 + $0x98] sm:$0xff]
  %v309 = vld [vmem:[%s2 + $0xa0] sm:$0xff]
  %v310 = vld [vmem:[%s2 + $0xa8] sm:$0xff]
  %v311 = vld [vmem:[%s2 + $0xb0] sm:$0xff]
  %v312 = vld [vmem:[%s2 + $0xb8] sm:$0xff]
  %v313 = vld [vmem:[%s2 + $0xc0] sm:$0xff]
  %v314 = vld [vmem:[%s2 + $0xc8] sm:$0xff]
  %v315 = vld [vmem:[%s2 + $0xd0] sm:$0xff]
  %v316 = vld [vmem:[%s2 + $0xd8] sm:$0xff]
  %v317 = vld [vmem:[%s2 + $0xe0] sm:$0xff]
  %v318 = vld [vmem:[%s2 + $0xe8] sm:$0xff]
  %v319 = vld [vmem:[%s2 + $0xf0] sm:$0xff]
  %v320 = vld [vmem:[%s2 + $0xf8] sm:$0xff]
  %v321 = vld [vmem:[#allocation3] sm:$0xff]
  %v322 = vld [vmem:[#allocation4] sm:$0xff]
  %v323 = vpack.c.bf16 %v321, %v321
  %v324 = vld [vmem:[#allocation2] sm:$0xff]
  %v325 = vld [vmem:[#allocation2 + $0x8] sm:$0xff]
  %v326 = vld [vmem:[#allocation2 + $0x10] sm:$0xff]
  %v327 = vld [vmem:[#allocation2 + $0x18] sm:$0xff]
  %v360 = vunpack.c.l.b16 %v289
  %v361 = vunpack.c.h.b16 %v289
  %v362 = vunpack.c.l.b16 %v290
  %v363 = vunpack.c.h.b16 %v290
  %v364 = vunpack.c.l.b16 %v291
  %v365 = vunpack.c.h.b16 %v291
  %v366 = vunpack.c.l.b16 %v292
  %v367 = vunpack.c.h.b16 %v292
  %v368 = vunpack.c.l.b16 %v293
  %v369 = vunpack.c.h.b16 %v293
  %v370 = vunpack.c.l.b16 %v294
  %v371 = vunpack.c.h.b16 %v294
  %v372 = vunpack.c.l.b16 %v295
  %v373 = vunpack.c.h.b16 %v295
  %v374 = vunpack.c.l.b16 %v296
  %v375 = vunpack.c.h.b16 %v296
  %v376 = vunpack.c.l.b16 %v297
  %v377 = vunpack.c.h.b16 %v297
  %v378 = vunpack.c.l.b16 %v298
  %v379 = vunpack.c.h.b16 %v298
  %v380 = vunpack.c.l.b16 %v299
  %v381 = vunpack.c.h.b16 %v299
  %v382 = vunpack.c.l.b16 %v300
  %v383 = vunpack.c.h.b16 %v300
  %v384 = vunpack.c.l.b16 %v301
  %v385 = vunpack.c.h.b16 %v301
  %v386 = vunpack.c.l.b16 %v302
  %v387 = vunpack.c.h.b16 %v302
  %v388 = vunpack.c.l.b16 %v303
  %v389 = vunpack.c.h.b16 %v303
  %v390 = vunpack.c.l.b16 %v304
  %v391 = vunpack.c.h.b16 %v304
  %v392 = vunpack.c.l.b16 %v305
  %v393 = vunpack.c.h.b16 %v305
  %v394 = vunpack.c.l.b16 %v306
  %v395 = vunpack.c.h.b16 %v306
  %v396 = vunpack.c.l.b16 %v307
  %v397 = vunpack.c.h.b16 %v307
  %v398 = vunpack.c.l.b16 %v308
  %v399 = vunpack.c.h.b16 %v308
  %v400 = vunpack.c.l.b16 %v309
  %v401 = vunpack.c.h.b16 %v309
  %v402 = vunpack.c.l.b16 %v310
  %v403 = vunpack.c.h.b16 %v310
  %v404 = vunpack.c.l.b16 %v311
  %v405 = vunpack.c.h.b16 %v311
  %v406 = vunpack.c.l.b16 %v312
  %v407 = vunpack.c.h.b16 %v312
  %v408 = vunpack.c.l.b16 %v313
  %v409 = vunpack.c.h.b16 %v313
  %v410 = vunpack.c.l.b16 %v314
  %v411 = vunpack.c.h.b16 %v314
  %v412 = vunpack.c.l.b16 %v315
  %v413 = vunpack.c.h.b16 %v315
  %v414 = vunpack.c.l.b16 %v316
  %v415 = vunpack.c.h.b16 %v316
  %v416 = vunpack.c.l.b16 %v317
  %v417 = vunpack.c.h.b16 %v317
  %v418 = vunpack.c.l.b16 %v318
  %v419 = vunpack.c.h.b16 %v318
  %v420 = vunpack.c.l.b16 %v319
  %v421 = vunpack.c.h.b16 %v319
  %v422 = vunpack.c.l.b16 %v320
  %v423 = vunpack.c.h.b16 %v320
  %v424 = vpack.c.b16 %v364, %v360
  %v425 = vpack.c.b16 %v365, %v361
  %v426 = vpack.c.b16 %v366, %v362
  %v427 = vpack.c.b16 %v367, %v363
  %v428 = vpack.c.b16 %v372, %v368
  %v429 = vpack.c.b16 %v373, %v369
  %v430 = vpack.c.b16 %v374, %v370
  %v431 = vpack.c.b16 %v375, %v371
  %v432 = vpack.c.b16 %v380, %v376
  %v433 = vpack.c.b16 %v381, %v377
  %v434 = vpack.c.b16 %v382, %v378
  %v435 = vpack.c.b16 %v383, %v379
  %v436 = vpack.c.b16 %v388, %v384
  %v437 = vpack.c.b16 %v389, %v385
  %v438 = vpack.c.b16 %v390, %v386
  %v439 = vpack.c.b16 %v391, %v387
  %v440 = vpack.c.b16 %v396, %v392
  %v441 = vpack.c.b16 %v397, %v393
  %v442 = vpack.c.b16 %v398, %v394
  %v443 = vpack.c.b16 %v399, %v395
  %v444 = vpack.c.b16 %v404, %v400
  %v445 = vpack.c.b16 %v405, %v401
  %v446 = vpack.c.b16 %v406, %v402
  %v447 = vpack.c.b16 %v407, %v403
  %v448 = vpack.c.b16 %v412, %v408
  %v449 = vpack.c.b16 %v413, %v409
  %v450 = vpack.c.b16 %v414, %v410
  %v451 = vpack.c.b16 %v415, %v411
  %v452 = vpack.c.b16 %v420, %v416
  %v453 = vpack.c.b16 %v421, %v417
  %v454 = vpack.c.b16 %v422, %v418
  %v455 = vpack.c.b16 %v423, %v419
  %488 = vmatprep.subr.bf16.mxu0 %v453
  %489 = vmatpush1.bf16.msra.mxu0 %v452
  %490 = vmatprep.subr.bf16.mxu0 %v449
  %491 = vmatpush1.bf16.msra.mxu0 %v448
  %492 = vmatprep.subr.bf16.mxu0 %v445
  %493 = vmatpush1.bf16.msra.mxu0 %v444
  %494 = vmatprep.subr.bf16.mxu0 %v441
  %495 = vmatpush1.bf16.msra.mxu0 %v440
  %496 = vmatprep.subr.bf16.mxu0 %v437
  %497 = vmatpush1.bf16.msra.mxu0 %v436
  %498 = vmatprep.subr.bf16.mxu0 %v433
  %499 = vmatpush1.bf16.msra.mxu0 %v432
  %500 = vmatprep.subr.bf16.mxu0 %v429
  %501 = vmatpush1.bf16.msra.mxu0 %v428
  %502 = vmatprep.subr.bf16.mxu0 %v425
  %503 = vmatpush1.bf16.msra.mxu0 %v424
  %504 = vmatprep.subr.bf16.mxu0 0
  %505 = vmatpush2.bf16.msra.mxu0 0
  %506 = vmatprep.subr.bf16.mxu0 0
  %507 = vmatpush2.bf16.msra.mxu0 0
  %508 = vmatprep.subr.bf16.mxu0 0
  %509 = vmatpush2.bf16.msra.mxu0 0
  %510 = vmatprep.subr.bf16.mxu0 0
  %511 = vmatpush2.bf16.msra.mxu0 0
  %512 = vmatprep.subr.bf16.mxu0 0
  %513 = vmatpush2.bf16.msra.mxu0 0
  %514 = vmatprep.subr.bf16.mxu0 0
  %515 = vmatpush2.bf16.msra.mxu0 0
  %516 = vmatprep.subr.bf16.mxu0 0
  %517 = vmatpush2.bf16.msra.mxu0 0
  %518 = vmatprep.subr.bf16.mxu0 0
  %519 = vmatpush2.bf16.msra.mxu0 0
  %520 = vmatprep.mubr.bf16.mxu0 0
  %521 = vmatmul.mubr.bf16.gmra.mxu0 %v323
  %v522 = vpop.f32.mrf.mxu0
  %v523 = vadd.f32 %v324, %v522
  %v524 = vpop.f32.mrf.mxu0
  %v525 = vadd.f32 %v325, %v524
  %v526 = vpop.f32.mrf.mxu0
  %v527 = vpop.f32.mrf.mxu0
  %528 = vdwg.mxu0
  %529 = vmatprep.subr.bf16.mxu0 %v455
  %530 = vmatpush1.bf16.msra.mxu0 %v454
  %531 = vmatprep.subr.bf16.mxu0 %v451
  %532 = vmatpush1.bf16.msra.mxu0 %v450
  %533 = vmatprep.subr.bf16.mxu0 %v447
  %534 = vmatpush1.bf16.msra.mxu0 %v446
  %535 = vmatprep.subr.bf16.mxu0 %v443
  %536 = vmatpush1.bf16.msra.mxu0 %v442
  %537 = vmatprep.subr.bf16.mxu0 %v439
  %538 = vmatpush1.bf16.msra.mxu0 %v438
  %539 = vmatprep.subr.bf16.mxu0 %v435
  %540 = vmatpush1.bf16.msra.mxu0 %v434
  %541 = vmatprep.subr.bf16.mxu0 %v431
  %542 = vmatpush1.bf16.msra.mxu0 %v430
  %543 = vmatprep.subr.bf16.mxu0 %v427
  %544 = vmatpush1.bf16.msra.mxu0 %v426
  %545 = vmatprep.subr.bf16.mxu0 0
  %546 = vmatpush2.bf16.msra.mxu0 0
  %547 = vmatprep.subr.bf16.mxu0 0
  %548 = vmatpush2.bf16.msra.mxu0 0
  %549 = vmatprep.subr.bf16.mxu0 0
  %550 = vmatpush2.bf16.msra.mxu0 0
  %551 = vmatprep.subr.bf16.mxu0 0
  %552 = vmatpush2.bf16.msra.mxu0 0
  %553 = vmatprep.subr.bf16.mxu0 0
  %554 = vmatpush2.bf16.msra.mxu0 0
  %555 = vmatprep.subr.bf16.mxu0 0
  %556 = vmatpush2.bf16.msra.mxu0 0
  %557 = vmatprep.subr.bf16.mxu0 0
  %558 = vmatpush2.bf16.msra.mxu0 0
  %559 = vmatprep.subr.bf16.mxu0 0
  %560 = vmatpush2.bf16.msra.mxu0 0
  %561 = vmatprep.mubr.bf16.mxu0 0
  %562 = vmatmul.mubr.bf16.gmra.mxu0 %v323
  %v563 = vpop.f32.mrf.mxu0
  %v564 = vadd.f32 %v326, %v563
  %v565 = vpop.f32.mrf.mxu0
  %v566 = vadd.f32 %v327, %v565
  %v567 = vpop.f32.mrf.mxu0
  %v568 = vpop.f32.mrf.mxu0
  %569 = vdwg.mxu0
  %v570 = vxor.u32 %v523, 2147483648
  %v571 = vxor.u32 %v525, 2147483648
  %v572 = vxor.u32 %v564, 2147483648
  %v573 = vmul.f32 %v570, 1.442695
  %v574 = vpow.pop %v573
  %v575 = vmul.f32 %v571, 1.442695
  %v576 = vpow.pop %v575
  %v577 = vmul.f32 %v572, 1.442695
  %v578 = vpow.pop %v577
  %v579 = vadd.f32 %v574, 1.0
  %v580 = vadd.f32 %v576, 1.0
  %v581 = vadd.f32 %v578, 1.0
  %v582 = vrcp.pop %v579
  %v583 = vmul.f32 1.0, %v582
  %v584 = vrcp.pop %v580
  %v585 = vmul.f32 1.0, %v584
  %v586 = vrcp.pop %v581
  %v587 = vmul.f32 1.0, %v586
  %v588 = vtanh.pop %v566
  %v589 = vmul.f32 %v583, %v322
  %v590 = vmul.f32 %v585, %v588
  %v591 = vadd.f32 %v589, %v590
  %v592 = vtanh.pop %v591
  %v593 = vmul.f32 %v587, %v592
  %v594 = vpack.c.bf16 %v593, %v593
  %s595 = scalar_lea.vmem [#allocation2], 32
  %v596 = vld [vmem:[%s595] sm:$0xff]
  %v597 = vld [vmem:[%s595 + $0x8] sm:$0xff]
  %v598 = vld [vmem:[%s595 + $0x10] sm:$0xff]
  %v599 = vld [vmem:[%s595 + $0x18] sm:$0xff]
  %600 = vmatprep.subr.bf16.mxu0 %v453
  %601 = vmatpush1.bf16.msra.mxu0 %v452
  %602 = vmatprep.subr.bf16.mxu0 %v449
  %603 = vmatpush1.bf16.msra.mxu0 %v448
  %604 = vmatprep.subr.bf16.mxu0 %v445
  %605 = vmatpush1.bf16.msra.mxu0 %v444
  %606 = vmatprep.subr.bf16.mxu0 %v441
  %607 = vmatpush1.bf16.msra.mxu0 %v440
  %608 = vmatprep.subr.bf16.mxu0 %v437
  %609 = vmatpush1.bf16.msra.mxu0 %v436
  %610 = vmatprep.subr.bf16.mxu0 %v433
  %611 = vmatpush1.bf16.msra.mxu0 %v432
  %612 = vmatprep.subr.bf16.mxu0 %v429
  %613 = vmatpush1.bf16.msra.mxu0 %v428
  %614 = vmatprep.subr.bf16.mxu0 %v425
  %615 = vmatpush1.bf16.msra.mxu0 %v424
  %616 = vmatprep.subr.bf16.mxu0 0
  %617 = vmatpush2.bf16.msra.mxu0 0
  %618 = vmatprep.subr.bf16.mxu0 0
  %619 = vmatpush2.bf16.msra.mxu0 0
  %620 = vmatprep.subr.bf16.mxu0 0
  %621 = vmatpush2.bf16.msra.mxu0 0
  %622 = vmatprep.subr.bf16.mxu0 0
  %623 = vmatpush2.bf16.msra.mxu0 0
  %624 = vmatprep.subr.bf16.mxu0 0
  %625 = vmatpush2.bf16.msra.mxu0 0
  %626 = vmatprep.subr.bf16.mxu0 0
  %627 = vmatpush2.bf16.msra.mxu0 0
  %628 = vmatprep.subr.bf16.mxu0 0
  %629 = vmatpush2.bf16.msra.mxu0 0
  %630 = vmatprep.subr.bf16.mxu0 0
  %631 = vmatpush2.bf16.msra.mxu0 0
  %632 = vmatprep.mubr.bf16.mxu0 0
  %633 = vmatmul.mubr.bf16.gmra.mxu0 %v594
  %v634 = vpop.f32.mrf.mxu0
  %v635 = vadd.f32 %v596, %v634
  %v636 = vpop.f32.mrf.mxu0
  %v637 = vadd.f32 %v597, %v636
  %v638 = vpop.f32.mrf.mxu0
  %v639 = vpop.f32.mrf.mxu0
  %640 = vdwg.mxu0
  %641 = vmatprep.subr.bf16.mxu0 %v455
  %642 = vmatpush1.bf16.msra.mxu0 %v454
  %643 = vmatprep.subr.bf16.mxu0 %v451
  %644 = vmatpush1.bf16.msra.mxu0 %v450
  %645 = vmatprep.subr.bf16.mxu0 %v447
  %646 = vmatpush1.bf16.msra.mxu0 %v446
  %647 = vmatprep.subr.bf16.mxu0 %v443
  %648 = vmatpush1.bf16.msra.mxu0 %v442
  %649 = vmatprep.subr.bf16.mxu0 %v439
  %650 = vmatpush1.bf16.msra.mxu0 %v438
  %651 = vmatprep.subr.bf16.mxu0 %v435
  %652 = vmatpush1.bf16.msra.mxu0 %v434
  %653 = vmatprep.subr.bf16.mxu0 %v431
  %654 = vmatpush1.bf16.msra.mxu0 %v430
  %655 = vmatprep.subr.bf16.mxu0 %v427
  %656 = vmatpush1.bf16.msra.mxu0 %v426
  %657 = vmatprep.subr.bf16.mxu0 0
  %658 = vmatpush2.bf16.msra.mxu0 0
  %659 = vmatprep.subr.bf16.mxu0 0
  %660 = vmatpush2.bf16.msra.mxu0 0
  %661 = vmatprep.subr.bf16.mxu0 0
  %662 = vmatpush2.bf16.msra.mxu0 0
  %663 = vmatprep.subr.bf16.mxu0 0
  %664 = vmatpush2.bf16.msra.mxu0 0
  %665 = vmatprep.subr.bf16.mxu0 0
  %666 = vmatpush2.bf16.msra.mxu0 0
  %667 = vmatprep.subr.bf16.mxu0 0
  %668 = vmatpush2.bf16.msra.mxu0 0
  %669 = vmatprep.subr.bf16.mxu0 0
  %670 = vmatpush2.bf16.msra.mxu0 0
  %671 = vmatprep.subr.bf16.mxu0 0
  %672 = vmatpush2.bf16.msra.mxu0 0
  %673 = vmatprep.mubr.bf16.mxu0 0
  %674 = vmatmul.mubr.bf16.gmra.mxu0 %v594
  %v675 = vpop.f32.mrf.mxu0
  %v676 = vadd.f32 %v598, %v675
  %v677 = vpop.f32.mrf.mxu0
  %v678 = vadd.f32 %v599, %v677
  %v679 = vpop.f32.mrf.mxu0
  %v680 = vpop.f32.mrf.mxu0
  %681 = vdwg.mxu0
  %v682 = vxor.u32 %v635, 2147483648
  %v683 = vxor.u32 %v637, 2147483648
  %v684 = vxor.u32 %v676, 2147483648
  %v685 = vmul.f32 %v682, 1.442695
  %v686 = vpow.pop %v685
  %v687 = vmul.f32 %v683, 1.442695
  %v688 = vpow.pop %v687
  %v689 = vmul.f32 %v684, 1.442695
  %v690 = vpow.pop %v689
  %v691 = vadd.f32 %v686, 1.0
  %v692 = vadd.f32 %v688, 1.0
  %v693 = vadd.f32 %v690, 1.0
  %v694 = vrcp.pop %v691
  %v695 = vmul.f32 1.0, %v694
  %v696 = vrcp.pop %v692
  %v697 = vmul.f32 1.0, %v696
  %v698 = vrcp.pop %v693
  %v699 = vmul.f32 1.0, %v698
  %v700 = vtanh.pop %v678
  %v701 = vmul.f32 %v695, %v591
  %v702 = vmul.f32 %v697, %v700
  %v703 = vadd.f32 %v701, %v702
  %v704 = vtanh.pop %v703
  %v705 = vmul.f32 %v699, %v704
  %v706 = vpack.c.bf16 %v705, %v705
  %s707 = scalar_lea.vmem [#allocation2], 64
  %v708 = vld [vmem:[%s707] sm:$0xff]
  %v709 = vld [vmem:[%s707 + $0x8] sm:$0xff]
  %v710 = vld [vmem:[%s707 + $0x10] sm:$0xff]
  %v711 = vld [vmem:[%s707 + $0x18] sm:$0xff]
  %712 = vmatprep.subr.bf16.mxu0 %v453
  %713 = vmatpush1.bf16.msra.mxu0 %v452
  %714 = vmatprep.subr.bf16.mxu0 %v449
  %715 = vmatpush1.bf16.msra.mxu0 %v448
  %716 = vmatprep.subr.bf16.mxu0 %v445
  %717 = vmatpush1.bf16.msra.mxu0 %v444
  %718 = vmatprep.subr.bf16.mxu0 %v441
  %719 = vmatpush1.bf16.msra.mxu0 %v440
  %720 = vmatprep.subr.bf16.mxu0 %v437
  %721 = vmatpush1.bf16.msra.mxu0 %v436
  %722 = vmatprep.subr.bf16.mxu0 %v433
  %723 = vmatpush1.bf16.msra.mxu0 %v432
  %724 = vmatprep.subr.bf16.mxu0 %v429
  %725 = vmatpush1.bf16.msra.mxu0 %v428
  %726 = vmatprep.subr.bf16.mxu0 %v425
  %727 = vmatpush1.bf16.msra.mxu0 %v424
  %728 = vmatprep.subr.bf16.mxu0 0
  %729 = vmatpush2.bf16.msra.mxu0 0
  %730 = vmatprep.subr.bf16.mxu0 0
  %731 = vmatpush2.bf16.msra.mxu0 0
  %732 = vmatprep.subr.bf16.mxu0 0
  %733 = vmatpush2.bf16.msra.mxu0 0
  %734 = vmatprep.subr.bf16.mxu0 0
  %735 = vmatpush2.bf16.msra.mxu0 0
  %736 = vmatprep.subr.bf16.mxu0 0
  %737 = vmatpush2.bf16.msra.mxu0 0
  %738 = vmatprep.subr.bf16.mxu0 0
  %739 = vmatpush2.bf16.msra.mxu0 0
  %740 = vmatprep.subr.bf16.mxu0 0
  %741 = vmatpush2.bf16.msra.mxu0 0
  %742 = vmatprep.subr.bf16.mxu0 0
  %743 = vmatpush2.bf16.msra.mxu0 0
  %744 = vmatprep.mubr.bf16.mxu0 0
  %745 = vmatmul.mubr.bf16.gmra.mxu0 %v706
  %v746 = vpop.f32.mrf.mxu0
  %v747 = vadd.f32 %v708, %v746
  %v748 = vpop.f32.mrf.mxu0
  %v749 = vadd.f32 %v709, %v748
  %v750 = vpop.f32.mrf.mxu0
  %v751 = vpop.f32.mrf.mxu0
  %752 = vdwg.mxu0
  %753 = vmatprep.subr.bf16.mxu0 %v455
  %754 = vmatpush1.bf16.msra.mxu0 %v454
  %755 = vmatprep.subr.bf16.mxu0 %v451
  %756 = vmatpush1.bf16.msra.mxu0 %v450
  %757 = vmatprep.subr.bf16.mxu0 %v447
  %758 = vmatpush1.bf16.msra.mxu0 %v446
  %759 = vmatprep.subr.bf16.mxu0 %v443
  %760 = vmatpush1.bf16.msra.mxu0 %v442
  %761 = vmatprep.subr.bf16.mxu0 %v439
  %762 = vmatpush1.bf16.msra.mxu0 %v438
  %763 = vmatprep.subr.bf16.mxu0 %v435
  %764 = vmatpush1.bf16.msra.mxu0 %v434
  %765 = vmatprep.subr.bf16.mxu0 %v431
  %766 = vmatpush1.bf16.msra.mxu0 %v430
  %767 = vmatprep.subr.bf16.mxu0 %v427
  %768 = vmatpush1.bf16.msra.mxu0 %v426
  %769 = vmatprep.subr.bf16.mxu0 0
  %770 = vmatpush2.bf16.msra.mxu0 0
  %771 = vmatprep.subr.bf16.mxu0 0
  %772 = vmatpush2.bf16.msra.mxu0 0
  %773 = vmatprep.subr.bf16.mxu0 0
  %774 = vmatpush2.bf16.msra.mxu0 0
  %775 = vmatprep.subr.bf16.mxu0 0
  %776 = vmatpush2.bf16.msra.mxu0 0
  %777 = vmatprep.subr.bf16.mxu0 0
  %778 = vmatpush2.bf16.msra.mxu0 0
  %779 = vmatprep.subr.bf16.mxu0 0
  %780 = vmatpush2.bf16.msra.mxu0 0
  %781 = vmatprep.subr.bf16.mxu0 0
  %782 = vmatpush2.bf16.msra.mxu0 0
  %783 = vmatprep.subr.bf16.mxu0 0
  %784 = vmatpush2.bf16.msra.mxu0 0
  %785 = vmatprep.mubr.bf16.mxu0 0
  %786 = vmatmul.mubr.bf16.gmra.mxu0 %v706
  %v787 = vpop.f32.mrf.mxu0
  %v788 = vadd.f32 %v710, %v787
  %v789 = vpop.f32.mrf.mxu0
  %v790 = vadd.f32 %v711, %v789
  %v791 = vpop.f32.mrf.mxu0
  %v792 = vpop.f32.mrf.mxu0
  %793 = vdwg.mxu0
  %v794 = vxor.u32 %v747, 2147483648
  %v795 = vxor.u32 %v749, 2147483648
  %v796 = vxor.u32 %v788, 2147483648
  %v797 = vmul.f32 %v794, 1.442695
  %v798 = vpow.pop %v797
  %v799 = vmul.f32 %v795, 1.442695
  %v800 = vpow.pop %v799
  %v801 = vmul.f32 %v796, 1.442695
  %v802 = vpow.pop %v801
  %v803 = vadd.f32 %v798, 1.0
  %v804 = vadd.f32 %v800, 1.0
  %v805 = vadd.f32 %v802, 1.0
  %v806 = vrcp.pop %v803
  %v807 = vmul.f32 1.0, %v806
  %v808 = vrcp.pop %v804
  %v809 = vmul.f32 1.0, %v808
  %v810 = vrcp.pop %v805
  %v811 = vmul.f32 1.0, %v810
  %v812 = vtanh.pop %v790
  %v813 = vmul.f32 %v807, %v703
  %v814 = vmul.f32 %v809, %v812
  %v815 = vadd.f32 %v813, %v814
  %v816 = vtanh.pop %v815
  %v817 = vmul.f32 %v811, %v816
  %v818 = vpack.c.bf16 %v817, %v817
  %s819 = scalar_lea.vmem [#allocation2], 96
  %v820 = vld [vmem:[%s819] sm:$0xff]
  %v821 = vld [vmem:[%s819 + $0x8] sm:$0xff]
  %v822 = vld [vmem:[%s819 + $0x10] sm:$0xff]
  %v823 = vld [vmem:[%s819 + $0x18] sm:$0xff]
  %824 = vmatprep.subr.bf16.mxu0 %v453
  %825 = vmatpush1.bf16.msra.mxu0 %v452
  %826 = vmatprep.subr.bf16.mxu0 %v449
  %827 = vmatpush1.bf16.msra.mxu0 %v448
  %828 = vmatprep.subr.bf16.mxu0 %v445
  %829 = vmatpush1.bf16.msra.mxu0 %v444
  %830 = vmatprep.subr.bf16.mxu0 %v441
  %831 = vmatpush1.bf16.msra.mxu0 %v440
  %832 = vmatprep.subr.bf16.mxu0 %v437
  %833 = vmatpush1.bf16.msra.mxu0 %v436
  %834 = vmatprep.subr.bf16.mxu0 %v433
  %835 = vmatpush1.bf16.msra.mxu0 %v432
  %836 = vmatprep.subr.bf16.mxu0 %v429
  %837 = vmatpush1.bf16.msra.mxu0 %v428
  %838 = vmatprep.subr.bf16.mxu0 %v425
  %839 = vmatpush1.bf16.msra.mxu0 %v424
  %840 = vmatprep.subr.bf16.mxu0 0
  %841 = vmatpush2.bf16.msra.mxu0 0
  %842 = vmatprep.subr.bf16.mxu0 0
  %843 = vmatpush2.bf16.msra.mxu0 0
  %844 = vmatprep.subr.bf16.mxu0 0
  %845 = vmatpush2.bf16.msra.mxu0 0
  %846 = vmatprep.subr.bf16.mxu0 0
  %847 = vmatpush2.bf16.msra.mxu0 0
  %848 = vmatprep.subr.bf16.mxu0 0
  %849 = vmatpush2.bf16.msra.mxu0 0
  %850 = vmatprep.subr.bf16.mxu0 0
  %851 = vmatpush2.bf16.msra.mxu0 0
  %852 = vmatprep.subr.bf16.mxu0 0
  %853 = vmatpush2.bf16.msra.mxu0 0
  %854 = vmatprep.subr.bf16.mxu0 0
  %855 = vmatpush2.bf16.msra.mxu0 0
  %856 = vmatprep.mubr.bf16.mxu0 0
  %857 = vmatmul.mubr.bf16.gmra.mxu0 %v818
  %v858 = vpop.f32.mrf.mxu0
  %v859 = vadd.f32 %v820, %v858
  %v860 = vpop.f32.mrf.mxu0
  %v861 = vadd.f32 %v821, %v860
  %v862 = vpop.f32.mrf.mxu0
  %v863 = vpop.f32.mrf.mxu0
  %864 = vdwg.mxu0
  %865 = vmatprep.subr.bf16.mxu0 %v455
  %866 = vmatpush1.bf16.msra.mxu0 %v454
  %867 = vmatprep.subr.bf16.mxu0 %v451
  %868 = vmatpush1.bf16.msra.mxu0 %v450
  %869 = vmatprep.subr.bf16.mxu0 %v447
  %870 = vmatpush1.bf16.msra.mxu0 %v446
  %871 = vmatprep.subr.bf16.mxu0 %v443
  %872 = vmatpush1.bf16.msra.mxu0 %v442
  %873 = vmatprep.subr.bf16.mxu0 %v439
  %874 = vmatpush1.bf16.msra.mxu0 %v438
  %875 = vmatprep.subr.bf16.mxu0 %v435
  %876 = vmatpush1.bf16.msra.mxu0 %v434
  %877 = vmatprep.subr.bf16.mxu0 %v431
  %878 = vmatpush1.bf16.msra.mxu0 %v430
  %879 = vmatprep.subr.bf16.mxu0 %v427
  %880 = vmatpush1.bf16.msra.mxu0 %v426
  %881 = vmatprep.subr.bf16.mxu0 0
  %882 = vmatpush2.bf16.msra.mxu0 0
  %883 = vmatprep.subr.bf16.mxu0 0
  %884 = vmatpush2.bf16.msra.mxu0 0
  %885 = vmatprep.subr.bf16.mxu0 0
  %886 = vmatpush2.bf16.msra.mxu0 0
  %887 = vmatprep.subr.bf16.mxu0 0
  %888 = vmatpush2.bf16.msra.mxu0 0
  %889 = vmatprep.subr.bf16.mxu0 0
  %890 = vmatpush2.bf16.msra.mxu0 0
  %891 = vmatprep.subr.bf16.mxu0 0
  %892 = vmatpush2.bf16.msra.mxu0 0
  %893 = vmatprep.subr.bf16.mxu0 0
  %894 = vmatpush2.bf16.msra.mxu0 0
  %895 = vmatprep.subr.bf16.mxu0 0
  %896 = vmatpush2.bf16.msra.mxu0 0
  %897 = vmatprep.mubr.bf16.mxu0 0
  %898 = vmatmul.mubr.bf16.gmra.mxu0 %v818
  %v899 = vpop.f32.mrf.mxu0
  %v900 = vadd.f32 %v822, %v899
  %v901 = vpop.f32.mrf.mxu0
  %v902 = vadd.f32 %v823, %v901
  %v903 = vpop.f32.mrf.mxu0
  %v904 = vpop.f32.mrf.mxu0
  %905 = vdwg.mxu0
  %v906 = vxor.u32 %v859, 2147483648
  %v907 = vxor.u32 %v861, 2147483648
  %v908 = vxor.u32 %v900, 2147483648
  %v909 = vmul.f32 %v906, 1.442695
  %v910 = vpow.pop %v909
  %v911 = vmul.f32 %v907, 1.442695
  %v912 = vpow.pop %v911
  %v913 = vmul.f32 %v908, 1.442695
  %v914 = vpow.pop %v913
  %v915 = vadd.f32 %v910, 1.0
  %v916 = vadd.f32 %v912, 1.0
  %v917 = vadd.f32 %v914, 1.0
  %v918 = vrcp.pop %v915
  %v919 = vmul.f32 1.0, %v918
  %v920 = vrcp.pop %v916
  %v921 = vmul.f32 1.0, %v920
  %v922 = vrcp.pop %v917
  %v923 = vmul.f32 1.0, %v922
  %v924 = vtanh.pop %v902
  %v925 = vmul.f32 %v919, %v815
  %v926 = vmul.f32 %v921, %v924
  %v927 = vadd.f32 %v925, %v926
  %v928 = vtanh.pop %v927
  %v929 = vmul.f32 %v923, %v928
  %v930 = vpack.c.bf16 %v929, %v929
  %s931 = scalar_lea.vmem [#allocation2], 128
  %v932 = vld [vmem:[%s931] sm:$0xff]
  %v933 = vld [vmem:[%s931 + $0x8] sm:$0xff]
  %v934 = vld [vmem:[%s931 + $0x10] sm:$0xff]
  %v935 = vld [vmem:[%s931 + $0x18] sm:$0xff]
  %936 = vmatprep.subr.bf16.mxu0 %v453
  %937 = vmatpush1.bf16.msra.mxu0 %v452
  %938 = vmatprep.subr.bf16.mxu0 %v449
  %939 = vmatpush1.bf16.msra.mxu0 %v448
  %940 = vmatprep.subr.bf16.mxu0 %v445
  %941 = vmatpush1.bf16.msra.mxu0 %v444
  %942 = vmatprep.subr.bf16.mxu0 %v441
  %943 = vmatpush1.bf16.msra.mxu0 %v440
  %944 = vmatprep.subr.bf16.mxu0 %v437
  %945 = vmatpush1.bf16.msra.mxu0 %v436
  %946 = vmatprep.subr.bf16.mxu0 %v433
  %947 = vmatpush1.bf16.msra.mxu0 %v432
  %948 = vmatprep.subr.bf16.mxu0 %v429
  %949 = vmatpush1.bf16.msra.mxu0 %v428
  %950 = vmatprep.subr.bf16.mxu0 %v425
  %951 = vmatpush1.bf16.msra.mxu0 %v424
  %952 = vmatprep.subr.bf16.mxu0 0
  %953 = vmatpush2.bf16.msra.mxu0 0
  %954 = vmatprep.subr.bf16.mxu0 0
  %955 = vmatpush2.bf16.msra.mxu0 0
  %956 = vmatprep.subr.bf16.mxu0 0
  %957 = vmatpush2.bf16.msra.mxu0 0
  %958 = vmatprep.subr.bf16.mxu0 0
  %959 = vmatpush2.bf16.msra.mxu0 0
  %960 = vmatprep.subr.bf16.mxu0 0
  %961 = vmatpush2.bf16.msra.mxu0 0
  %962 = vmatprep.subr.bf16.mxu0 0
  %963 = vmatpush2.bf16.msra.mxu0 0
  %964 = vmatprep.subr.bf16.mxu0 0
  %965 = vmatpush2.bf16.msra.mxu0 0
  %966 = vmatprep.subr.bf16.mxu0 0
  %967 = vmatpush2.bf16.msra.mxu0 0
  %968 = vmatprep.mubr.bf16.mxu0 0
  %969 = vmatmul.mubr.bf16.gmra.mxu0 %v930
  %v970 = vpop.f32.mrf.mxu0
  %v971 = vadd.f32 %v932, %v970
  %v972 = vpop.f32.mrf.mxu0
  %v973 = vadd.f32 %v933, %v972
  %v974 = vpop.f32.mrf.mxu0
  %v975 = vpop.f32.mrf.mxu0
  %976 = vdwg.mxu0
  %977 = vmatprep.subr.bf16.mxu0 %v455
  %978 = vmatpush1.bf16.msra.mxu0 %v454
  %979 = vmatprep.subr.bf16.mxu0 %v451
  %980 = vmatpush1.bf16.msra.mxu0 %v450
  %981 = vmatprep.subr.bf16.mxu0 %v447
  %982 = vmatpush1.bf16.msra.mxu0 %v446
  %983 = vmatprep.subr.bf16.mxu0 %v443
  %984 = vmatpush1.bf16.msra.mxu0 %v442
  %985 = vmatprep.subr.bf16.mxu0 %v439
  %986 = vmatpush1.bf16.msra.mxu0 %v438
  %987 = vmatprep.subr.bf16.mxu0 %v435
  %988 = vmatpush1.bf16.msra.mxu0 %v434
  %989 = vmatprep.subr.bf16.mxu0 %v431
  %990 = vmatpush1.bf16.msra.mxu0 %v430
  %991 = vmatprep.subr.bf16.mxu0 %v427
  %992 = vmatpush1.bf16.msra.mxu0 %v426
  %993 = vmatprep.subr.bf16.mxu0 0
  %994 = vmatpush2.bf16.msra.mxu0 0
  %995 = vmatprep.subr.bf16.mxu0 0
  %996 = vmatpush2.bf16.msra.mxu0 0
  %997 = vmatprep.subr.bf16.mxu0 0
  %998 = vmatpush2.bf16.msra.mxu0 0
  %999 = vmatprep.subr.bf16.mxu0 0
  %1000 = vmatpush2.bf16.msra.mxu0 0
  %1001 = vmatprep.subr.bf16.mxu0 0
  %1002 = vmatpush2.bf16.msra.mxu0 0
  %1003 = vmatprep.subr.bf16.mxu0 0
  %1004 = vmatpush2.bf16.msra.mxu0 0
  %1005 = vmatprep.subr.bf16.mxu0 0
  %1006 = vmatpush2.bf16.msra.mxu0 0
  %1007 = vmatprep.subr.bf16.mxu0 0
  %1008 = vmatpush2.bf16.msra.mxu0 0
  %1009 = vmatprep.mubr.bf16.mxu0 0
  %1010 = vmatmul.mubr.bf16.gmra.mxu0 %v930
  %v1011 = vpop.f32.mrf.mxu0
  %v1012 = vadd.f32 %v934, %v1011
  %v1013 = vpop.f32.mrf.mxu0
  %v1014 = vadd.f32 %v935, %v1013
  %v1015 = vpop.f32.mrf.mxu0
  %v1016 = vpop.f32.mrf.mxu0
  %1017 = vdwg.mxu0
  %v1018 = vxor.u32 %v971, 2147483648
  %v1019 = vxor.u32 %v973, 2147483648
  %v1020 = vxor.u32 %v1012, 2147483648
  %v1021 = vmul.f32 %v1018, 1.442695
  %v1022 = vpow.pop %v1021
  %v1023 = vmul.f32 %v1019, 1.442695
  %v1024 = vpow.pop %v1023
  %v1025 = vmul.f32 %v1020, 1.442695
  %v1026 = vpow.pop %v1025
  %v1027 = vadd.f32 %v1022, 1.0
  %v1028 = vadd.f32 %v1024, 1.0
  %v1029 = vadd.f32 %v1026, 1.0
  %v1030 = vrcp.pop %v1027
  %v1031 = vmul.f32 1.0, %v1030
  %v1032 = vrcp.pop %v1028
  %v1033 = vmul.f32 1.0, %v1032
  %v1034 = vrcp.pop %v1029
  %v1035 = vmul.f32 1.0, %v1034
  %v1036 = vtanh.pop %v1014
  %v1037 = vmul.f32 %v1031, %v927
  %v1038 = vmul.f32 %v1033, %v1036
  %v1039 = vadd.f32 %v1037, %v1038
  %v1040 = vtanh.pop %v1039
  %v1041 = vmul.f32 %v1035, %v1040
  %v1042 = vpack.c.bf16 %v1041, %v1041
  %s1043 = scalar_lea.vmem [#allocation2], 160
  %v1044 = vld [vmem:[%s1043] sm:$0xff]
  %v1045 = vld [vmem:[%s1043 + $0x8] sm:$0xff]
  %v1046 = vld [vmem:[%s1043 + $0x10] sm:$0xff]
  %v1047 = vld [vmem:[%s1043 + $0x18] sm:$0xff]
  %1048 = vmatprep.subr.bf16.mxu0 %v453
  %1049 = vmatpush1.bf16.msra.mxu0 %v452
  %1050 = vmatprep.subr.bf16.mxu0 %v449
  %1051 = vmatpush1.bf16.msra.mxu0 %v448
  %1052 = vmatprep.subr.bf16.mxu0 %v445
  %1053 = vmatpush1.bf16.msra.mxu0 %v444
  %1054 = vmatprep.subr.bf16.mxu0 %v441
  %1055 = vmatpush1.bf16.msra.mxu0 %v440
  %1056 = vmatprep.subr.bf16.mxu0 %v437
  %1057 = vmatpush1.bf16.msra.mxu0 %v436
  %1058 = vmatprep.subr.bf16.mxu0 %v433
  %1059 = vmatpush1.bf16.msra.mxu0 %v432
  %1060 = vmatprep.subr.bf16.mxu0 %v429
  %1061 = vmatpush1.bf16.msra.mxu0 %v428
  %1062 = vmatprep.subr.bf16.mxu0 %v425
  %1063 = vmatpush1.bf16.msra.mxu0 %v424
  %1064 = vmatprep.subr.bf16.mxu0 0
  %1065 = vmatpush2.bf16.msra.mxu0 0
  %1066 = vmatprep.subr.bf16.mxu0 0
  %1067 = vmatpush2.bf16.msra.mxu0 0
  %1068 = vmatprep.subr.bf16.mxu0 0
  %1069 = vmatpush2.bf16.msra.mxu0 0
  %1070 = vmatprep.subr.bf16.mxu0 0
  %1071 = vmatpush2.bf16.msra.mxu0 0
  %1072 = vmatprep.subr.bf16.mxu0 0
  %1073 = vmatpush2.bf16.msra.mxu0 0
  %1074 = vmatprep.subr.bf16.mxu0 0
  %1075 = vmatpush2.bf16.msra.mxu0 0
  %1076 = vmatprep.subr.bf16.mxu0 0
  %1077 = vmatpush2.bf16.msra.mxu0 0
  %1078 = vmatprep.subr.bf16.mxu0 0
  %1079 = vmatpush2.bf16.msra.mxu0 0
  %1080 = vmatprep.mubr.bf16.mxu0 0
  %1081 = vmatmul.mubr.bf16.gmra.mxu0 %v1042
  %v1082 = vpop.f32.mrf.mxu0
  %v1083 = vadd.f32 %v1044, %v1082
  %v1084 = vpop.f32.mrf.mxu0
  %v1085 = vadd.f32 %v1045, %v1084
  %v1086 = vpop.f32.mrf.mxu0
  %v1087 = vpop.f32.mrf.mxu0
  %1088 = vdwg.mxu0
  %1089 = vmatprep.subr.bf16.mxu0 %v455
  %1090 = vmatpush1.bf16.msra.mxu0 %v454
  %1091 = vmatprep.subr.bf16.mxu0 %v451
  %1092 = vmatpush1.bf16.msra.mxu0 %v450
  %1093 = vmatprep.subr.bf16.mxu0 %v447
  %1094 = vmatpush1.bf16.msra.mxu0 %v446
  %1095 = vmatprep.subr.bf16.mxu0 %v443
  %1096 = vmatpush1.bf16.msra.mxu0 %v442
  %1097 = vmatprep.subr.bf16.mxu0 %v439
  %1098 = vmatpush1.bf16.msra.mxu0 %v438
  %1099 = vmatprep.subr.bf16.mxu0 %v435
  %1100 = vmatpush1.bf16.msra.mxu0 %v434
  %1101 = vmatprep.subr.bf16.mxu0 %v431
  %1102 = vmatpush1.bf16.msra.mxu0 %v430
  %1103 = vmatprep.subr.bf16.mxu0 %v427
  %1104 = vmatpush1.bf16.msra.mxu0 %v426
  %1105 = vmatprep.subr.bf16.mxu0 0
  %1106 = vmatpush2.bf16.msra.mxu0 0
  %1107 = vmatprep.subr.bf16.mxu0 0
  %1108 = vmatpush2.bf16.msra.mxu0 0
  %1109 = vmatprep.subr.bf16.mxu0 0
  %1110 = vmatpush2.bf16.msra.mxu0 0
  %1111 = vmatprep.subr.bf16.mxu0 0
  %1112 = vmatpush2.bf16.msra.mxu0 0
  %1113 = vmatprep.subr.bf16.mxu0 0
  %1114 = vmatpush2.bf16.msra.mxu0 0
  %1115 = vmatprep.subr.bf16.mxu0 0
  %1116 = vmatpush2.bf16.msra.mxu0 0
  %1117 = vmatprep.subr.bf16.mxu0 0
  %1118 = vmatpush2.bf16.msra.mxu0 0
  %1119 = vmatprep.subr.bf16.mxu0 0
  %1120 = vmatpush2.bf16.msra.mxu0 0
  %1121 = vmatprep.mubr.bf16.mxu0 0
  %1122 = vmatmul.mubr.bf16.gmra.mxu0 %v1042
  %v1123 = vpop.f32.mrf.mxu0
  %v1124 = vadd.f32 %v1046, %v1123
  %v1125 = vpop.f32.mrf.mxu0
  %v1126 = vadd.f32 %v1047, %v1125
  %v1127 = vpop.f32.mrf.mxu0
  %v1128 = vpop.f32.mrf.mxu0
  %1129 = vdwg.mxu0
  %v1130 = vxor.u32 %v1083, 2147483648
  %v1131 = vxor.u32 %v1085, 2147483648
  %v1132 = vxor.u32 %v1124, 2147483648
  %v1133 = vmul.f32 %v1130, 1.442695
  %v1134 = vpow.pop %v1133
  %v1135 = vmul.f32 %v1131, 1.442695
  %v1136 = vpow.pop %v1135
  %v1137 = vmul.f32 %v1132, 1.442695
  %v1138 = vpow.pop %v1137
  %v1139 = vadd.f32 %v1134, 1.0
  %v1140 = vadd.f32 %v1136, 1.0
  %v1141 = vadd.f32 %v1138, 1.0
  %v1142 = vrcp.pop %v1139
  %v1143 = vmul.f32 1.0, %v1142
  %v1144 = vrcp.pop %v1140
  %v1145 = vmul.f32 1.0, %v1144
  %v1146 = vrcp.pop %v1141
  %v1147 = vmul.f32 1.0, %v1146
  %v1148 = vtanh.pop %v1126
  %v1149 = vmul.f32 %v1143, %v1039
  %v1150 = vmul.f32 %v1145, %v1148
  %v1151 = vadd.f32 %v1149, %v1150
  %v1152 = vtanh.pop %v1151
  %v1153 = vmul.f32 %v1147, %v1152
  %v1154 = vpack.c.bf16 %v1153, %v1153
  %s1155 = scalar_lea.vmem [#allocation2], 192
  %v1156 = vld [vmem:[%s1155] sm:$0xff]
  %v1157 = vld [vmem:[%s1155 + $0x8] sm:$0xff]
  %v1158 = vld [vmem:[%s1155 + $0x10] sm:$0xff]
  %v1159 = vld [vmem:[%s1155 + $0x18] sm:$0xff]
  %1160 = vmatprep.subr.bf16.mxu0 %v453
  %1161 = vmatpush1.bf16.msra.mxu0 %v452
  %1162 = vmatprep.subr.bf16.mxu0 %v449
  %1163 = vmatpush1.bf16.msra.mxu0 %v448
  %1164 = vmatprep.subr.bf16.mxu0 %v445
  %1165 = vmatpush1.bf16.msra.mxu0 %v444
  %1166 = vmatprep.subr.bf16.mxu0 %v441
  %1167 = vmatpush1.bf16.msra.mxu0 %v440
  %1168 = vmatprep.subr.bf16.mxu0 %v437
  %1169 = vmatpush1.bf16.msra.mxu0 %v436
  %1170 = vmatprep.subr.bf16.mxu0 %v433
  %1171 = vmatpush1.bf16.msra.mxu0 %v432
  %1172 = vmatprep.subr.bf16.mxu0 %v429
  %1173 = vmatpush1.bf16.msra.mxu0 %v428
  %1174 = vmatprep.subr.bf16.mxu0 %v425
  %1175 = vmatpush1.bf16.msra.mxu0 %v424
  %1176 = vmatprep.subr.bf16.mxu0 0
  %1177 = vmatpush2.bf16.msra.mxu0 0
  %1178 = vmatprep.subr.bf16.mxu0 0
  %1179 = vmatpush2.bf16.msra.mxu0 0
  %1180 = vmatprep.subr.bf16.mxu0 0
  %1181 = vmatpush2.bf16.msra.mxu0 0
  %1182 = vmatprep.subr.bf16.mxu0 0
  %1183 = vmatpush2.bf16.msra.mxu0 0
  %1184 = vmatprep.subr.bf16.mxu0 0
  %1185 = vmatpush2.bf16.msra.mxu0 0
  %1186 = vmatprep.subr.bf16.mxu0 0
  %1187 = vmatpush2.bf16.msra.mxu0 0
  %1188 = vmatprep.subr.bf16.mxu0 0
  %1189 = vmatpush2.bf16.msra.mxu0 0
  %1190 = vmatprep.subr.bf16.mxu0 0
  %1191 = vmatpush2.bf16.msra.mxu0 0
  %1192 = vmatprep.mubr.bf16.mxu0 0
  %1193 = vmatmul.mubr.bf16.gmra.mxu0 %v1154
  %v1194 = vpop.f32.mrf.mxu0
  %v1195 = vadd.f32 %v1156, %v1194
  %v1196 = vpop.f32.mrf.mxu0
  %v1197 = vadd.f32 %v1157, %v1196
  %v1198 = vpop.f32.mrf.mxu0
  %v1199 = vpop.f32.mrf.mxu0
  %1200 = vdwg.mxu0
  %1201 = vmatprep.subr.bf16.mxu0 %v455
  %1202 = vmatpush1.bf16.msra.mxu0 %v454
  %1203 = vmatprep.subr.bf16.mxu0 %v451
  %1204 = vmatpush1.bf16.msra.mxu0 %v450
  %1205 = vmatprep.subr.bf16.mxu0 %v447
  %1206 = vmatpush1.bf16.msra.mxu0 %v446
  %1207 = vmatprep.subr.bf16.mxu0 %v443
  %1208 = vmatpush1.bf16.msra.mxu0 %v442
  %1209 = vmatprep.subr.bf16.mxu0 %v439
  %1210 = vmatpush1.bf16.msra.mxu0 %v438
  %1211 = vmatprep.subr.bf16.mxu0 %v435
  %1212 = vmatpush1.bf16.msra.mxu0 %v434
  %1213 = vmatprep.subr.bf16.mxu0 %v431
  %1214 = vmatpush1.bf16.msra.mxu0 %v430
  %1215 = vmatprep.subr.bf16.mxu0 %v427
  %1216 = vmatpush1.bf16.msra.mxu0 %v426
  %1217 = vmatprep.subr.bf16.mxu0 0
  %1218 = vmatpush2.bf16.msra.mxu0 0
  %1219 = vmatprep.subr.bf16.mxu0 0
  %1220 = vmatpush2.bf16.msra.mxu0 0
  %1221 = vmatprep.subr.bf16.mxu0 0
  %1222 = vmatpush2.bf16.msra.mxu0 0
  %1223 = vmatprep.subr.bf16.mxu0 0
  %1224 = vmatpush2.bf16.msra.mxu0 0
  %1225 = vmatprep.subr.bf16.mxu0 0
  %1226 = vmatpush2.bf16.msra.mxu0 0
  %1227 = vmatprep.subr.bf16.mxu0 0
  %1228 = vmatpush2.bf16.msra.mxu0 0
  %1229 = vmatprep.subr.bf16.mxu0 0
  %1230 = vmatpush2.bf16.msra.mxu0 0
  %1231 = vmatprep.subr.bf16.mxu0 0
  %1232 = vmatpush2.bf16.msra.mxu0 0
  %1233 = vmatprep.mubr.bf16.mxu0 0
  %1234 = vmatmul.mubr.bf16.gmra.mxu0 %v1154
  %v1235 = vpop.f32.mrf.mxu0
  %v1236 = vadd.f32 %v1158, %v1235
  %v1237 = vpop.f32.mrf.mxu0
  %v1238 = vadd.f32 %v1159, %v1237
  %v1239 = vpop.f32.mrf.mxu0
  %v1240 = vpop.f32.mrf.mxu0
  %1241 = vdwg.mxu0
  %v1242 = vxor.u32 %v1195, 2147483648
  %v1243 = vxor.u32 %v1197, 2147483648
  %v1244 = vxor.u32 %v1236, 2147483648
  %v1245 = vmul.f32 %v1242, 1.442695
  %v1246 = vpow.pop %v1245
  %v1247 = vmul.f32 %v1243, 1.442695
  %v1248 = vpow.pop %v1247
  %v1249 = vmul.f32 %v1244, 1.442695
  %v1250 = vpow.pop %v1249
  %v1251 = vadd.f32 %v1246, 1.0
  %v1252 = vadd.f32 %v1248, 1.0
  %v1253 = vadd.f32 %v1250, 1.0
  %v1254 = vrcp.pop %v1251
  %v1255 = vmul.f32 1.0, %v1254
  %v1256 = vrcp.pop %v1252
  %v1257 = vmul.f32 1.0, %v1256
  %v1258 = vrcp.pop %v1253
  %v1259 = vmul.f32 1.0, %v1258
  %v1260 = vtanh.pop %v1238
  %v1261 = vmul.f32 %v1255, %v1151
  %v1262 = vmul.f32 %v1257, %v1260
  %v1263 = vadd.f32 %v1261, %v1262
  %v1264 = vtanh.pop %v1263
  %v1265 = vmul.f32 %v1259, %v1264
  %v1266 = vpack.c.bf16 %v1265, %v1265
  %s1267 = scalar_lea.vmem [#allocation2], 224
  %v1268 = vld [vmem:[%s1267] sm:$0xff]
  %v1269 = vld [vmem:[%s1267 + $0x8] sm:$0xff]
  %v1270 = vld [vmem:[%s1267 + $0x10] sm:$0xff]
  %v1271 = vld [vmem:[%s1267 + $0x18] sm:$0xff]
  %1272 = vmatprep.subr.bf16.mxu0 %v453
  %1273 = vmatpush1.bf16.msra.mxu0 %v452
  %1274 = vmatprep.subr.bf16.mxu0 %v449
  %1275 = vmatpush1.bf16.msra.mxu0 %v448
  %1276 = vmatprep.subr.bf16.mxu0 %v445
  %1277 = vmatpush1.bf16.msra.mxu0 %v444
  %1278 = vmatprep.subr.bf16.mxu0 %v441
  %1279 = vmatpush1.bf16.msra.mxu0 %v440
  %1280 = vmatprep.subr.bf16.mxu0 %v437
  %1281 = vmatpush1.bf16.msra.mxu0 %v436
  %1282 = vmatprep.subr.bf16.mxu0 %v433
  %1283 = vmatpush1.bf16.msra.mxu0 %v432
  %1284 = vmatprep.subr.bf16.mxu0 %v429
  %1285 = vmatpush1.bf16.msra.mxu0 %v428
  %1286 = vmatprep.subr.bf16.mxu0 %v425
  %1287 = vmatpush1.bf16.msra.mxu0 %v424
  %1288 = vmatprep.subr.bf16.mxu0 0
  %1289 = vmatpush2.bf16.msra.mxu0 0
  %1290 = vmatprep.subr.bf16.mxu0 0
  %1291 = vmatpush2.bf16.msra.mxu0 0
  %1292 = vmatprep.subr.bf16.mxu0 0
  %1293 = vmatpush2.bf16.msra.mxu0 0
  %1294 = vmatprep.subr.bf16.mxu0 0
  %1295 = vmatpush2.bf16.msra.mxu0 0
  %1296 = vmatprep.subr.bf16.mxu0 0
  %1297 = vmatpush2.bf16.msra.mxu0 0
  %1298 = vmatprep.subr.bf16.mxu0 0
  %1299 = vmatpush2.bf16.msra.mxu0 0
  %1300 = vmatprep.subr.bf16.mxu0 0
  %1301 = vmatpush2.bf16.msra.mxu0 0
  %1302 = vmatprep.subr.bf16.mxu0 0
  %1303 = vmatpush2.bf16.msra.mxu0 0
  %1304 = vmatprep.mubr.bf16.mxu0 0
  %1305 = vmatmul.mubr.bf16.gmra.mxu0 %v1266
  %v1306 = vpop.f32.mrf.mxu0
  %v1307 = vadd.f32 %v1268, %v1306
  %v1308 = vpop.f32.mrf.mxu0
  %v1309 = vadd.f32 %v1269, %v1308
  %v1310 = vpop.f32.mrf.mxu0
  %v1311 = vpop.f32.mrf.mxu0
  %1312 = vdwg.mxu0
  %1313 = vmatprep.subr.bf16.mxu0 %v455
  %1314 = vmatpush1.bf16.msra.mxu0 %v454
  %1315 = vmatprep.subr.bf16.mxu0 %v451
  %1316 = vmatpush1.bf16.msra.mxu0 %v450
  %1317 = vmatprep.subr.bf16.mxu0 %v447
  %1318 = vmatpush1.bf16.msra.mxu0 %v446
  %1319 = vmatprep.subr.bf16.mxu0 %v443
  %1320 = vmatpush1.bf16.msra.mxu0 %v442
  %1321 = vmatprep.subr.bf16.mxu0 %v439
  %1322 = vmatpush1.bf16.msra.mxu0 %v438
  %1323 = vmatprep.subr.bf16.mxu0 %v435
  %1324 = vmatpush1.bf16.msra.mxu0 %v434
  %1325 = vmatprep.subr.bf16.mxu0 %v431
  %1326 = vmatpush1.bf16.msra.mxu0 %v430
  %1327 = vmatprep.subr.bf16.mxu0 %v427
  %1328 = vmatpush1.bf16.msra.mxu0 %v426
  %1329 = vmatprep.subr.bf16.mxu0 0
  %1330 = vmatpush2.bf16.msra.mxu0 0
  %1331 = vmatprep.subr.bf16.mxu0 0
  %1332 = vmatpush2.bf16.msra.mxu0 0
  %1333 = vmatprep.subr.bf16.mxu0 0
  %1334 = vmatpush2.bf16.msra.mxu0 0
  %1335 = vmatprep.subr.bf16.mxu0 0
  %1336 = vmatpush2.bf16.msra.mxu0 0
  %1337 = vmatprep.subr.bf16.mxu0 0
  %1338 = vmatpush2.bf16.msra.mxu0 0
  %1339 = vmatprep.subr.bf16.mxu0 0
  %1340 = vmatpush2.bf16.msra.mxu0 0
  %1341 = vmatprep.subr.bf16.mxu0 0
  %1342 = vmatpush2.bf16.msra.mxu0 0
  %1343 = vmatprep.subr.bf16.mxu0 0
  %1344 = vmatpush2.bf16.msra.mxu0 0
  %1345 = vmatprep.mubr.bf16.mxu0 0
  %1346 = vmatmul.mubr.bf16.gmra.mxu0 %v1266
  %v1347 = vpop.f32.mrf.mxu0
  %v1348 = vadd.f32 %v1270, %v1347
  %v1349 = vpop.f32.mrf.mxu0
  %v1350 = vadd.f32 %v1271, %v1349
  %v1351 = vpop.f32.mrf.mxu0
  %v1352 = vpop.f32.mrf.mxu0
  %1353 = vdwg.mxu0
  %v1354 = vxor.u32 %v1307, 2147483648
  %v1355 = vxor.u32 %v1309, 2147483648
  %v1356 = vxor.u32 %v1348, 2147483648
  %v1357 = vmul.f32 %v1354, 1.442695
  %v1358 = vpow.pop %v1357
  %v1359 = vmul.f32 %v1355, 1.442695
  %v1360 = vpow.pop %v1359
  %v1361 = vmul.f32 %v1356, 1.442695
  %v1362 = vpow.pop %v1361
  %v1363 = vadd.f32 %v1358, 1.0
  %v1364 = vadd.f32 %v1360, 1.0
  %v1365 = vadd.f32 %v1362, 1.0
  %v1366 = vrcp.pop %v1363
  %v1367 = vmul.f32 1.0, %v1366
  %v1368 = vrcp.pop %v1364
  %v1369 = vmul.f32 1.0, %v1368
  %v1370 = vrcp.pop %v1365
  %v1371 = vmul.f32 1.0, %v1370
  %v1372 = vtanh.pop %v1350
  %v1373 = vmul.f32 %v1367, %v1263
  %v1374 = vmul.f32 %v1369, %v1372
  %v1375 = vadd.f32 %v1373, %v1374
  %v1376 = vtanh.pop %v1375
  %v1377 = vmul.f32 %v1371, %v1376
  %1378 = vst [vmem:[#allocation3] sm:$0xff] %v1377
  %1379 = vst [vmem:[#allocation4] sm:$0xff] %v1375
  // Predicated region
  $region22: #{lstm_forward.1} parent=0 // pred_check
    %p1380 = pneg %p18
  $region23: #{lstm_forward.1} parent=0 // pred_check_branch
    %1382 = sbr.rel (%p1380) target = $region25
  $region24: #{lstm_forward.1} parent=0 // pred_region
    %1383 = vst [vmem:[%s4] sm:$0xff] %v1377
  $region25: #{lstm_forward.1} parent=0 // pred_fallthru
    _
  // Predicated region
  $region26: #{lstm_forward.1} parent=0 // pred_check
    _
  $region27: #{lstm_forward.1} parent=0 // pred_check_branch
    %1385 = sbr.rel (0) target = $region29
  $region28: #{lstm_forward.1} parent=0 // pred_region
    _
  $region29: #{lstm_forward.1} parent=0 // pred_fallthru
    _
  // Predicated region
  $region30: #{lstm_forward.1} parent=0 // pred_check
    _
  $region31: #{lstm_forward.1} parent=0 // pred_check_branch
    %1387 = sbr.rel (0) target = $region33
  $region32: #{lstm_forward.1} parent=0 // pred_region
    _
  $region33: #{lstm_forward.1} parent=0 // pred_fallthru
    _

</llo_original>
